<compile_context>
chip_gen: v7x
topology: tpu7x:2x2x1
jax: 0.10.0
libtpu: 0.0.40
codegen_flags: <defaults>
</compile_context>

<pallas_src>
import jax
import jax.numpy as jnp
from jax.experimental import pallas as pl
from jax.experimental.pallas import tpu as pltpu


def gru_subnet_forward(x_bntc, params, *, b_tile=1, use_bf16_matmuls=False):
    """JAX wrapper: [B, N, T, C] float32 -> [B, N, out_c] float32."""
    B, N, T, C = x_bntc.shape
    F = T * C
    H = params["whr"].shape[0]
    O = params["wfc"].shape[1]
    H3 = 3 * H

    assert B % b_tile == 0, (B, b_tile)
    num_tiles = B // b_tile
    NB = N * b_tile

    # ---- wrapper-side layout prep (kernel never reshapes) ---------------------
    # [B, N, T, C] -> [num_tiles, N*b_tile, F], rows t-major within each tile
    # (row = t*b_tile + j).  For b_tile=1 the transpose is a no-op.
    x = (x_bntc.reshape(num_tiles, b_tile, N, F)
               .transpose(0, 2, 1, 3)
               .reshape(num_tiles, NB, F))

    # Fused weights, gate order (r, z, n) along the last axis.
    wi = jnp.concatenate([params["wir"], params["wiz"], params["win"]], axis=1)  # [F, 3H]
    wh = jnp.concatenate([params["whr"], params["whz"], params["whn"]], axis=1)  # [H, 3H]
    # r/z bias pairs are safely pre-summed; b_in rides with the input projection,
    # b_hn must stay separate (it sits inside the r * (...) term).
    bi = jnp.concatenate([params["bir"] + params["bhr"],
                          params["biz"] + params["bhz"],
                          params["bin"]], axis=1)                                # [1, 3H]
    bhn = params["bhn"]                                                          # [1, H]
    wfc = params["wfc"]                                                          # [H, O]
    bfc = params["bfc"]                                                          # [1, O]

    # Optional bf16 operands for the two big batched matmuls (MXU-native on
    # v6e/v7x); the recurrence and all elementwise math stay f32 for accuracy.
    mm_dtype = jnp.bfloat16 if use_bf16_matmuls else jnp.float32
    x = x.astype(mm_dtype)
    wi = wi.astype(mm_dtype)
    wfc = wfc.astype(mm_dtype)

    def kernel(x_ref, wi_ref, wh_ref, bi_ref, bhn_ref, wfc_ref, bfc_ref, out_ref):
        # ---- hoisted input projection: one matmul covers all N steps ----------
        xp = jnp.dot(x_ref[...], wi_ref[...],
                     preferred_element_type=jnp.float32) + bi_ref[...]          # [N*Bt, 3H] f32

        # Hoist the h-independent gate slices out of the recurrence (done once
        # on the batched tensor instead of 3x per unrolled step).
        xr_all = xp[:, :H]
        xz_all = xp[:, H:2 * H]
        xn_all = xp[:, 2 * H:]
        wh_v = wh_ref[...]
        bhn_b = jnp.broadcast_to(bhn_ref[...], (b_tile, H))                     # hoisted broadcast

        # ---- recurrence: N is small & static -> fully unrolled ----------------
        h = jnp.zeros((b_tile, H), jnp.float32)
        hs = []                       # register-resident history (a few vregs at these sizes)
        for t in range(N):
            r0, r1 = t * b_tile, (t + 1) * b_tile
            hp = jnp.dot(h, wh_v, preferred_element_type=jnp.float32)           # [Bt, 3H]
            r = jax.nn.sigmoid(xr_all[r0:r1, :] + hp[:, :H])
            z = jax.nn.sigmoid(xz_all[r0:r1, :] + hp[:, H:2 * H])
            n = jnp.tanh(xn_all[r0:r1, :] + r * (hp[:, 2 * H:] + bhn_b))
            h = (1.0 - z) * n + z * h
            hs.append(h)

        # ---- batched fc + LeakyReLU(0.01): one matmul, one writeback ----------
        hs_all = jnp.concatenate(hs, axis=0)                                    # [N*Bt, H] t-major
        o = jnp.dot(hs_all.astype(wfc_ref.dtype), wfc_ref[...],
                    preferred_element_type=jnp.float32) + bfc_ref[...]          # [N*Bt, O]
        out_ref[...] = jnp.where(o > 0.0, o, 0.01 * o)
        # TODO(synk): at production sizes make H a multiple of 128 (or un-fuse wh)
        # so gate slices land on lane boundaries, and widen/transpose the output
        # slab so the final writeback is lane-dense instead of O=8 masked stores.

    vmem_space = pltpu.MemorySpace.VMEM

    def invariant_spec(shape):
        nd = len(shape)
        return pl.BlockSpec(shape, lambda i: (0,) * nd, memory_space=vmem_space)

    in_specs = [
        pl.BlockSpec((None, NB, F), lambda i: (i, 0, 0), memory_space=vmem_space),  # x tile
        invariant_spec((F, H3)),   # wi
        invariant_spec((H, H3)),   # wh
        invariant_spec((1, H3)),   # bi
        invariant_spec((1, H)),    # bhn
        invariant_spec((H, O)),    # wfc
        invariant_spec((1, O)),    # bfc
    ]
    out_specs = pl.BlockSpec((None, NB, O), lambda i: (i, 0, 0), memory_space=vmem_space)

    # VMEM budget: double-buffered x/out tiles + grid-invariant operands + in-kernel
    # intermediates, with generous headroom.  Capped at 32 MiB so the limit is valid
    # on every generation (v7x physical VMEM is 64 MiB; v5e/v6e have 128 MiB).
    est = 4 * (2 * NB * (F + O) + F * H3 + H * H3 + H * O + 4 * H3
               + 8 * NB * (H3 + H))
    vmem_limit = int(min(max(2 * est, 8 * 1024 * 1024), 32 * 1024 * 1024))

    out = pl.pallas_call(
        kernel,
        out_shape=jax.ShapeDtypeStruct((num_tiles, NB, O), jnp.float32),
        grid=(num_tiles,),
        in_specs=in_specs,
        out_specs=out_specs,
        compiler_params=pltpu.CompilerParams(
            dimension_semantics=("parallel",),     # batch tiles shard across TCs on v7x
            vmem_limit_bytes=vmem_limit),
    )(x, wi, wh, bi, bhn, wfc, bfc)

    # Kernel rows are t-major within each batch tile; undo in the wrapper.
    out = (out.reshape(num_tiles, N, b_tile, O)
              .transpose(0, 2, 1, 3)
              .reshape(B, N, O))
    return out
    # Note: on single-TC chips (v5e/v6e) a larger b_tile (up to B) batches the
    # recurrence into fewer, wider matmuls; b_tile=1 maximizes v7x TC sharding.


def gru_net_forward(data, params, *, b_tile=1, use_bf16_matmuls=False):
    """Mirrors GRUNet.forward(data, device): reads data['flow_x']."""
    return gru_subnet_forward(data["flow_x"], params,
                              b_tile=b_tile, use_bf16_matmuls=use_bf16_matmuls)


def init_params(key, in_c, hid_c, out_c):
    """Deterministic synthetic parameters (shapes match nn.GRU + nn.Linear)."""
    ks = jax.random.split(key, 16)
    s_gru = 1.0 / jnp.sqrt(hid_c)
    s_fc = 1.0 / jnp.sqrt(hid_c)

    def u(k, shape, s):
        return jax.random.uniform(k, shape, jnp.float32, -s, s)

    return {
        # input-to-hidden weights, stored transposed as [in_c, hid_c]
        "wir": u(ks[0], (in_c, hid_c), s_gru),
        "wiz": u(ks[1], (in_c, hid_c), s_gru),
        "win": u(ks[2], (in_c, hid_c), s_gru),
        # hidden-to-hidden weights, stored transposed as [hid_c, hid_c]
        "whr": u(ks[3], (hid_c, hid_c), s_gru),
        "whz": u(ks[4], (hid_c, hid_c), s_gru),
        "whn": u(ks[5], (hid_c, hid_c), s_gru),
        # biases as [1, hid_c]
        "bir": u(ks[6], (1, hid_c), s_gru),
        "biz": u(ks[7], (1, hid_c), s_gru),
        "bin": u(ks[8], (1, hid_c), s_gru),
        "bhr": u(ks[9], (1, hid_c), s_gru),
        "bhz": u(ks[10], (1, hid_c), s_gru),
        "bhn": u(ks[11], (1, hid_c), s_gru),
        # fc, stored transposed as [hid_c, out_c], bias [1, out_c]
        "wfc": u(ks[12], (hid_c, out_c), s_fc),
        "bfc": u(ks[13], (1, out_c), s_fc),
    }


def reference_forward(x_bntc, params):
    """Pure-JAX reference (lax.scan GRU) for correctness checking."""
    B, N, T, C = x_bntc.shape
    x = x_bntc.reshape(B, N, T * C)
    H = params["whr"].shape[0]

    def step(h, x_t):
        r = jax.nn.sigmoid(x_t @ params["wir"] + params["bir"] +
                           h @ params["whr"] + params["bhr"])
        z = jax.nn.sigmoid(x_t @ params["wiz"] + params["biz"] +
                           h @ params["whz"] + params["bhz"])
        n = jnp.tanh(x_t @ params["win"] + params["bin"] +
                     r * (h @ params["whn"] + params["bhn"]))
        h_new = (1.0 - z) * n + z * h
        return h_new, h_new

    h0 = jnp.zeros((B, H), jnp.float32)
    _, hs = jax.lax.scan(step, h0, jnp.transpose(x, (1, 0, 2)))  # [N, B, H]
    hs = jnp.transpose(hs, (1, 0, 2))                            # [B, N, H]
    o = hs @ params["wfc"] + params["bfc"]
    return jnp.where(o > 0.0, o, 0.01 * o)


if __name__ == "__main__":
    # Small shapes consistent with the module: flow_x [B, N, T, C]
    B, N, T, C = 2, 16, 8, 4
    in_c, hid_c, out_c = T * C, 32, 8

    key = jax.random.PRNGKey(0)
    k_x, k_p = jax.random.split(key)
    flow_x = jax.random.normal(k_x, (B, N, T, C), jnp.float32)
    params = init_params(k_p, in_c, hid_c, out_c)

    data = {"flow_x": flow_x}
    out = jax.block_until_ready(gru_net_forward(data, params, b_tile=1))
    assert out.shape == (B, N, out_c), out.shape

    ref = jax.block_until_ready(reference_forward(flow_x, params))
    assert jnp.allclose(out, ref, atol=1e-2, rtol=1e-2), (
        float(jnp.max(jnp.abs(out - ref))))

    print("KERNEL_OK")
</pallas_src>

<mosaic_0001>
module attributes {stable_mosaic.version = 11 : i64} {
  func.func @kernel(%arg0: i32, %arg1: memref<1x16x32xf32, #tpu.memory_space<vmem>>, %arg2: memref<32x96xf32, #tpu.memory_space<vmem>>, %arg3: memref<32x96xf32, #tpu.memory_space<vmem>>, %arg4: memref<1x96xf32, #tpu.memory_space<vmem>>, %arg5: memref<1x32xf32, #tpu.memory_space<vmem>>, %arg6: memref<32x8xf32, #tpu.memory_space<vmem>>, %arg7: memref<1x8xf32, #tpu.memory_space<vmem>>, %arg8: memref<1x16x8xf32, #tpu.memory_space<vmem>>) attributes {dimension_semantics = [#tpu.dimension_semantics<parallel>], iteration_bounds = array<i64: 2>, scalar_prefetch = 0 : i64, scratch_operands = 0 : i64, tpu.core_type = #tpu.core_type<tc>, window_params = [{transform_indices = @transform_0, window_bounds = array<i64: 1, 16, 32>}, {pipeline_mode = #tpu.pipeline_mode<synchronous>, transform_indices = @transform_1, window_bounds = array<i64: 32, 96>}, {pipeline_mode = #tpu.pipeline_mode<synchronous>, transform_indices = @transform_2, window_bounds = array<i64: 32, 96>}, {pipeline_mode = #tpu.pipeline_mode<synchronous>, transform_indices = @transform_3, window_bounds = array<i64: 1, 96>}, {pipeline_mode = #tpu.pipeline_mode<synchronous>, transform_indices = @transform_4, window_bounds = array<i64: 1, 32>}, {pipeline_mode = #tpu.pipeline_mode<synchronous>, transform_indices = @transform_5, window_bounds = array<i64: 32, 8>}, {pipeline_mode = #tpu.pipeline_mode<synchronous>, transform_indices = @transform_6, window_bounds = array<i64: 1, 8>}, {transform_indices = @transform_7, window_bounds = array<i64: 1, 16, 8>}]} {
    %c0 = arith.constant 0 : index
    %c0_0 = arith.constant 0 : index
    %c0_1 = arith.constant 0 : index
    %0 = vector.load %arg1[%c0, %c0_0, %c0_1] : memref<1x16x32xf32, #tpu.memory_space<vmem>>, vector<1x16x32xf32>
    %1 = vector.shape_cast %0 : vector<1x16x32xf32> to vector<16x32xf32>
    %c0_2 = arith.constant 0 : index
    %c0_3 = arith.constant 0 : index
    %2 = vector.load %arg2[%c0_2, %c0_3] : memref<32x96xf32, #tpu.memory_space<vmem>>, vector<32x96xf32>
    %cst = arith.constant dense<0.000000e+00> : vector<16x96xf32>
    %3 = tpu.matmul %1, %2, %cst {dimension_numbers = #tpu.dot_dimension_numbers<[1], [0], [0], [1], [0, 0, 1, 1], [], []>} : vector<16x32xf32>, vector<32x96xf32>, vector<16x96xf32> -> vector<16x96xf32>
    %c0_4 = arith.constant 0 : index
    %c0_5 = arith.constant 0 : index
    %4 = vector.load %arg4[%c0_4, %c0_5] : memref<1x96xf32, #tpu.memory_space<vmem>>, vector<1x96xf32>
    %5 = vector.broadcast %4 : vector<1x96xf32> to vector<16x96xf32>
    %6 = arith.addf %3, %5 : vector<16x96xf32>
    %7 = vector.extract_strided_slice %6 {offsets = [0, 0], sizes = [16, 32], strides = [1, 1]} : vector<16x96xf32> to vector<16x32xf32>
    %8 = vector.extract_strided_slice %6 {offsets = [0, 32], sizes = [16, 32], strides = [1, 1]} : vector<16x96xf32> to vector<16x32xf32>
    %9 = vector.extract_strided_slice %6 {offsets = [0, 64], sizes = [16, 32], strides = [1, 1]} : vector<16x96xf32> to vector<16x32xf32>
    %c0_6 = arith.constant 0 : index
    %c0_7 = arith.constant 0 : index
    %10 = vector.load %arg3[%c0_6, %c0_7] : memref<32x96xf32, #tpu.memory_space<vmem>>, vector<32x96xf32>
    %c0_8 = arith.constant 0 : index
    %c0_9 = arith.constant 0 : index
    %11 = vector.load %arg5[%c0_8, %c0_9] : memref<1x32xf32, #tpu.memory_space<vmem>>, vector<1x32xf32>
    %cst_10 = arith.constant 0.000000e+00 : f32
    %12 = vector.broadcast %cst_10 : f32 to vector<1x32xf32>
    %cst_11 = arith.constant dense<0.000000e+00> : vector<1x96xf32>
    %13 = tpu.matmul %12, %10, %cst_11 {dimension_numbers = #tpu.dot_dimension_numbers<[1], [0], [0], [1], [0, 0, 1, 1], [], []>} : vector<1x32xf32>, vector<32x96xf32>, vector<1x96xf32> -> vector<1x96xf32>
    %14 = vector.extract_strided_slice %7 {offsets = [0, 0], sizes = [1, 32], strides = [1, 1]} : vector<16x32xf32> to vector<1x32xf32>
    %15 = vector.extract_strided_slice %13 {offsets = [0, 0], sizes = [1, 32], strides = [1, 1]} : vector<1x96xf32> to vector<1x32xf32>
    %16 = arith.addf %14, %15 : vector<1x32xf32>
    %17 = arith.negf %16 : vector<1x32xf32>
    %18 = math.exp %17 : vector<1x32xf32>
    %cst_12 = arith.constant 1.000000e+00 : f32
    %19 = vector.broadcast %cst_12 : f32 to vector<1x32xf32>
    %20 = arith.addf %19, %18 : vector<1x32xf32>
    %21 = arith.divf %19, %20 : vector<1x32xf32>
    %22 = vector.extract_strided_slice %8 {offsets = [0, 0], sizes = [1, 32], strides = [1, 1]} : vector<16x32xf32> to vector<1x32xf32>
    %23 = vector.extract_strided_slice %13 {offsets = [0, 32], sizes = [1, 32], strides = [1, 1]} : vector<1x96xf32> to vector<1x32xf32>
    %24 = arith.addf %22, %23 : vector<1x32xf32>
    %25 = arith.negf %24 : vector<1x32xf32>
    %26 = math.exp %25 : vector<1x32xf32>
    %cst_13 = arith.constant 1.000000e+00 : f32
    %27 = vector.broadcast %cst_13 : f32 to vector<1x32xf32>
    %28 = arith.addf %27, %26 : vector<1x32xf32>
    %29 = arith.divf %27, %28 : vector<1x32xf32>
    %30 = vector.extract_strided_slice %9 {offsets = [0, 0], sizes = [1, 32], strides = [1, 1]} : vector<16x32xf32> to vector<1x32xf32>
    %31 = vector.extract_strided_slice %13 {offsets = [0, 64], sizes = [1, 32], strides = [1, 1]} : vector<1x96xf32> to vector<1x32xf32>
    %32 = arith.addf %31, %11 : vector<1x32xf32>
    %33 = arith.mulf %21, %32 : vector<1x32xf32>
    %34 = arith.addf %30, %33 : vector<1x32xf32>
    %35 = math.tanh %34 : vector<1x32xf32>
    %cst_14 = arith.constant 1.000000e+00 : f32
    %36 = vector.broadcast %cst_14 : f32 to vector<1x32xf32>
    %37 = arith.subf %36, %29 : vector<1x32xf32>
    %38 = arith.mulf %37, %35 : vector<1x32xf32>
    %39 = arith.mulf %29, %12 : vector<1x32xf32>
    %40 = arith.addf %38, %39 : vector<1x32xf32>
    %cst_15 = arith.constant dense<0.000000e+00> : vector<1x96xf32>
    %41 = tpu.matmul %40, %10, %cst_15 {dimension_numbers = #tpu.dot_dimension_numbers<[1], [0], [0], [1], [0, 0, 1, 1], [], []>} : vector<1x32xf32>, vector<32x96xf32>, vector<1x96xf32> -> vector<1x96xf32>
    %42 = vector.extract_strided_slice %7 {offsets = [1, 0], sizes = [1, 32], strides = [1, 1]} : vector<16x32xf32> to vector<1x32xf32>
    %43 = vector.extract_strided_slice %41 {offsets = [0, 0], sizes = [1, 32], strides = [1, 1]} : vector<1x96xf32> to vector<1x32xf32>
    %44 = arith.addf %42, %43 : vector<1x32xf32>
    %45 = arith.negf %44 : vector<1x32xf32>
    %46 = math.exp %45 : vector<1x32xf32>
    %cst_16 = arith.constant 1.000000e+00 : f32
    %47 = vector.broadcast %cst_16 : f32 to vector<1x32xf32>
    %48 = arith.addf %47, %46 : vector<1x32xf32>
    %49 = arith.divf %47, %48 : vector<1x32xf32>
    %50 = vector.extract_strided_slice %8 {offsets = [1, 0], sizes = [1, 32], strides = [1, 1]} : vector<16x32xf32> to vector<1x32xf32>
    %51 = vector.extract_strided_slice %41 {offsets = [0, 32], sizes = [1, 32], strides = [1, 1]} : vector<1x96xf32> to vector<1x32xf32>
    %52 = arith.addf %50, %51 : vector<1x32xf32>
    %53 = arith.negf %52 : vector<1x32xf32>
    %54 = math.exp %53 : vector<1x32xf32>
    %cst_17 = arith.constant 1.000000e+00 : f32
    %55 = vector.broadcast %cst_17 : f32 to vector<1x32xf32>
    %56 = arith.addf %55, %54 : vector<1x32xf32>
    %57 = arith.divf %55, %56 : vector<1x32xf32>
    %58 = vector.extract_strided_slice %9 {offsets = [1, 0], sizes = [1, 32], strides = [1, 1]} : vector<16x32xf32> to vector<1x32xf32>
    %59 = vector.extract_strided_slice %41 {offsets = [0, 64], sizes = [1, 32], strides = [1, 1]} : vector<1x96xf32> to vector<1x32xf32>
    %60 = arith.addf %59, %11 : vector<1x32xf32>
    %61 = arith.mulf %49, %60 : vector<1x32xf32>
    %62 = arith.addf %58, %61 : vector<1x32xf32>
    %63 = math.tanh %62 : vector<1x32xf32>
    %cst_18 = arith.constant 1.000000e+00 : f32
    %64 = vector.broadcast %cst_18 : f32 to vector<1x32xf32>
    %65 = arith.subf %64, %57 : vector<1x32xf32>
    %66 = arith.mulf %65, %63 : vector<1x32xf32>
    %67 = arith.mulf %57, %40 : vector<1x32xf32>
    %68 = arith.addf %66, %67 : vector<1x32xf32>
    %cst_19 = arith.constant dense<0.000000e+00> : vector<1x96xf32>
    %69 = tpu.matmul %68, %10, %cst_19 {dimension_numbers = #tpu.dot_dimension_numbers<[1], [0], [0], [1], [0, 0, 1, 1], [], []>} : vector<1x32xf32>, vector<32x96xf32>, vector<1x96xf32> -> vector<1x96xf32>
    %70 = vector.extract_strided_slice %7 {offsets = [2, 0], sizes = [1, 32], strides = [1, 1]} : vector<16x32xf32> to vector<1x32xf32>
    %71 = vector.extract_strided_slice %69 {offsets = [0, 0], sizes = [1, 32], strides = [1, 1]} : vector<1x96xf32> to vector<1x32xf32>
    %72 = arith.addf %70, %71 : vector<1x32xf32>
    %73 = arith.negf %72 : vector<1x32xf32>
    %74 = math.exp %73 : vector<1x32xf32>
    %cst_20 = arith.constant 1.000000e+00 : f32
    %75 = vector.broadcast %cst_20 : f32 to vector<1x32xf32>
    %76 = arith.addf %75, %74 : vector<1x32xf32>
    %77 = arith.divf %75, %76 : vector<1x32xf32>
    %78 = vector.extract_strided_slice %8 {offsets = [2, 0], sizes = [1, 32], strides = [1, 1]} : vector<16x32xf32> to vector<1x32xf32>
    %79 = vector.extract_strided_slice %69 {offsets = [0, 32], sizes = [1, 32], strides = [1, 1]} : vector<1x96xf32> to vector<1x32xf32>
    %80 = arith.addf %78, %79 : vector<1x32xf32>
    %81 = arith.negf %80 : vector<1x32xf32>
    %82 = math.exp %81 : vector<1x32xf32>
    %cst_21 = arith.constant 1.000000e+00 : f32
    %83 = vector.broadcast %cst_21 : f32 to vector<1x32xf32>
    %84 = arith.addf %83, %82 : vector<1x32xf32>
    %85 = arith.divf %83, %84 : vector<1x32xf32>
    %86 = vector.extract_strided_slice %9 {offsets = [2, 0], sizes = [1, 32], strides = [1, 1]} : vector<16x32xf32> to vector<1x32xf32>
    %87 = vector.extract_strided_slice %69 {offsets = [0, 64], sizes = [1, 32], strides = [1, 1]} : vector<1x96xf32> to vector<1x32xf32>
    %88 = arith.addf %87, %11 : vector<1x32xf32>
    %89 = arith.mulf %77, %88 : vector<1x32xf32>
    %90 = arith.addf %86, %89 : vector<1x32xf32>
    %91 = math.tanh %90 : vector<1x32xf32>
    %cst_22 = arith.constant 1.000000e+00 : f32
    %92 = vector.broadcast %cst_22 : f32 to vector<1x32xf32>
    %93 = arith.subf %92, %85 : vector<1x32xf32>
    %94 = arith.mulf %93, %91 : vector<1x32xf32>
    %95 = arith.mulf %85, %68 : vector<1x32xf32>
    %96 = arith.addf %94, %95 : vector<1x32xf32>
    %cst_23 = arith.constant dense<0.000000e+00> : vector<1x96xf32>
    %97 = tpu.matmul %96, %10, %cst_23 {dimension_numbers = #tpu.dot_dimension_numbers<[1], [0], [0], [1], [0, 0, 1, 1], [], []>} : vector<1x32xf32>, vector<32x96xf32>, vector<1x96xf32> -> vector<1x96xf32>
    %98 = vector.extract_strided_slice %7 {offsets = [3, 0], sizes = [1, 32], strides = [1, 1]} : vector<16x32xf32> to vector<1x32xf32>
    %99 = vector.extract_strided_slice %97 {offsets = [0, 0], sizes = [1, 32], strides = [1, 1]} : vector<1x96xf32> to vector<1x32xf32>
    %100 = arith.addf %98, %99 : vector<1x32xf32>
    %101 = arith.negf %100 : vector<1x32xf32>
    %102 = math.exp %101 : vector<1x32xf32>
    %cst_24 = arith.constant 1.000000e+00 : f32
    %103 = vector.broadcast %cst_24 : f32 to vector<1x32xf32>
    %104 = arith.addf %103, %102 : vector<1x32xf32>
    %105 = arith.divf %103, %104 : vector<1x32xf32>
    %106 = vector.extract_strided_slice %8 {offsets = [3, 0], sizes = [1, 32], strides = [1, 1]} : vector<16x32xf32> to vector<1x32xf32>
    %107 = vector.extract_strided_slice %97 {offsets = [0, 32], sizes = [1, 32], strides = [1, 1]} : vector<1x96xf32> to vector<1x32xf32>
    %108 = arith.addf %106, %107 : vector<1x32xf32>
    %109 = arith.negf %108 : vector<1x32xf32>
    %110 = math.exp %109 : vector<1x32xf32>
    %cst_25 = arith.constant 1.000000e+00 : f32
    %111 = vector.broadcast %cst_25 : f32 to vector<1x32xf32>
    %112 = arith.addf %111, %110 : vector<1x32xf32>
    %113 = arith.divf %111, %112 : vector<1x32xf32>
    %114 = vector.extract_strided_slice %9 {offsets = [3, 0], sizes = [1, 32], strides = [1, 1]} : vector<16x32xf32> to vector<1x32xf32>
    %115 = vector.extract_strided_slice %97 {offsets = [0, 64], sizes = [1, 32], strides = [1, 1]} : vector<1x96xf32> to vector<1x32xf32>
    %116 = arith.addf %115, %11 : vector<1x32xf32>
    %117 = arith.mulf %105, %116 : vector<1x32xf32>
    %118 = arith.addf %114, %117 : vector<1x32xf32>
    %119 = math.tanh %118 : vector<1x32xf32>
    %cst_26 = arith.constant 1.000000e+00 : f32
    %120 = vector.broadcast %cst_26 : f32 to vector<1x32xf32>
    %121 = arith.subf %120, %113 : vector<1x32xf32>
    %122 = arith.mulf %121, %119 : vector<1x32xf32>
    %123 = arith.mulf %113, %96 : vector<1x32xf32>
    %124 = arith.addf %122, %123 : vector<1x32xf32>
    %cst_27 = arith.constant dense<0.000000e+00> : vector<1x96xf32>
    %125 = tpu.matmul %124, %10, %cst_27 {dimension_numbers = #tpu.dot_dimension_numbers<[1], [0], [0], [1], [0, 0, 1, 1], [], []>} : vector<1x32xf32>, vector<32x96xf32>, vector<1x96xf32> -> vector<1x96xf32>
    %126 = vector.extract_strided_slice %7 {offsets = [4, 0], sizes = [1, 32], strides = [1, 1]} : vector<16x32xf32> to vector<1x32xf32>
    %127 = vector.extract_strided_slice %125 {offsets = [0, 0], sizes = [1, 32], strides = [1, 1]} : vector<1x96xf32> to vector<1x32xf32>
    %128 = arith.addf %126, %127 : vector<1x32xf32>
    %129 = arith.negf %128 : vector<1x32xf32>
    %130 = math.exp %129 : vector<1x32xf32>
    %cst_28 = arith.constant 1.000000e+00 : f32
    %131 = vector.broadcast %cst_28 : f32 to vector<1x32xf32>
    %132 = arith.addf %131, %130 : vector<1x32xf32>
    %133 = arith.divf %131, %132 : vector<1x32xf32>
    %134 = vector.extract_strided_slice %8 {offsets = [4, 0], sizes = [1, 32], strides = [1, 1]} : vector<16x32xf32> to vector<1x32xf32>
    %135 = vector.extract_strided_slice %125 {offsets = [0, 32], sizes = [1, 32], strides = [1, 1]} : vector<1x96xf32> to vector<1x32xf32>
    %136 = arith.addf %134, %135 : vector<1x32xf32>
    %137 = arith.negf %136 : vector<1x32xf32>
    %138 = math.exp %137 : vector<1x32xf32>
    %cst_29 = arith.constant 1.000000e+00 : f32
    %139 = vector.broadcast %cst_29 : f32 to vector<1x32xf32>
    %140 = arith.addf %139, %138 : vector<1x32xf32>
    %141 = arith.divf %139, %140 : vector<1x32xf32>
    %142 = vector.extract_strided_slice %9 {offsets = [4, 0], sizes = [1, 32], strides = [1, 1]} : vector<16x32xf32> to vector<1x32xf32>
    %143 = vector.extract_strided_slice %125 {offsets = [0, 64], sizes = [1, 32], strides = [1, 1]} : vector<1x96xf32> to vector<1x32xf32>
    %144 = arith.addf %143, %11 : vector<1x32xf32>
    %145 = arith.mulf %133, %144 : vector<1x32xf32>
    %146 = arith.addf %142, %145 : vector<1x32xf32>
    %147 = math.tanh %146 : vector<1x32xf32>
    %cst_30 = arith.constant 1.000000e+00 : f32
    %148 = vector.broadcast %cst_30 : f32 to vector<1x32xf32>
    %149 = arith.subf %148, %141 : vector<1x32xf32>
    %150 = arith.mulf %149, %147 : vector<1x32xf32>
    %151 = arith.mulf %141, %124 : vector<1x32xf32>
    %152 = arith.addf %150, %151 : vector<1x32xf32>
    %cst_31 = arith.constant dense<0.000000e+00> : vector<1x96xf32>
    %153 = tpu.matmul %152, %10, %cst_31 {dimension_numbers = #tpu.dot_dimension_numbers<[1], [0], [0], [1], [0, 0, 1, 1], [], []>} : vector<1x32xf32>, vector<32x96xf32>, vector<1x96xf32> -> vector<1x96xf32>
    %154 = vector.extract_strided_slice %7 {offsets = [5, 0], sizes = [1, 32], strides = [1, 1]} : vector<16x32xf32> to vector<1x32xf32>
    %155 = vector.extract_strided_slice %153 {offsets = [0, 0], sizes = [1, 32], strides = [1, 1]} : vector<1x96xf32> to vector<1x32xf32>
    %156 = arith.addf %154, %155 : vector<1x32xf32>
    %157 = arith.negf %156 : vector<1x32xf32>
    %158 = math.exp %157 : vector<1x32xf32>
    %cst_32 = arith.constant 1.000000e+00 : f32
    %159 = vector.broadcast %cst_32 : f32 to vector<1x32xf32>
    %160 = arith.addf %159, %158 : vector<1x32xf32>
    %161 = arith.divf %159, %160 : vector<1x32xf32>
    %162 = vector.extract_strided_slice %8 {offsets = [5, 0], sizes = [1, 32], strides = [1, 1]} : vector<16x32xf32> to vector<1x32xf32>
    %163 = vector.extract_strided_slice %153 {offsets = [0, 32], sizes = [1, 32], strides = [1, 1]} : vector<1x96xf32> to vector<1x32xf32>
    %164 = arith.addf %162, %163 : vector<1x32xf32>
    %165 = arith.negf %164 : vector<1x32xf32>
    %166 = math.exp %165 : vector<1x32xf32>
    %cst_33 = arith.constant 1.000000e+00 : f32
    %167 = vector.broadcast %cst_33 : f32 to vector<1x32xf32>
    %168 = arith.addf %167, %166 : vector<1x32xf32>
    %169 = arith.divf %167, %168 : vector<1x32xf32>
    %170 = vector.extract_strided_slice %9 {offsets = [5, 0], sizes = [1, 32], strides = [1, 1]} : vector<16x32xf32> to vector<1x32xf32>
    %171 = vector.extract_strided_slice %153 {offsets = [0, 64], sizes = [1, 32], strides = [1, 1]} : vector<1x96xf32> to vector<1x32xf32>
    %172 = arith.addf %171, %11 : vector<1x32xf32>
    %173 = arith.mulf %161, %172 : vector<1x32xf32>
    %174 = arith.addf %170, %173 : vector<1x32xf32>
    %175 = math.tanh %174 : vector<1x32xf32>
    %cst_34 = arith.constant 1.000000e+00 : f32
    %176 = vector.broadcast %cst_34 : f32 to vector<1x32xf32>
    %177 = arith.subf %176, %169 : vector<1x32xf32>
    %178 = arith.mulf %177, %175 : vector<1x32xf32>
    %179 = arith.mulf %169, %152 : vector<1x32xf32>
    %180 = arith.addf %178, %179 : vector<1x32xf32>
    %cst_35 = arith.constant dense<0.000000e+00> : vector<1x96xf32>
    %181 = tpu.matmul %180, %10, %cst_35 {dimension_numbers = #tpu.dot_dimension_numbers<[1], [0], [0], [1], [0, 0, 1, 1], [], []>} : vector<1x32xf32>, vector<32x96xf32>, vector<1x96xf32> -> vector<1x96xf32>
    %182 = vector.extract_strided_slice %7 {offsets = [6, 0], sizes = [1, 32], strides = [1, 1]} : vector<16x32xf32> to vector<1x32xf32>
    %183 = vector.extract_strided_slice %181 {offsets = [0, 0], sizes = [1, 32], strides = [1, 1]} : vector<1x96xf32> to vector<1x32xf32>
    %184 = arith.addf %182, %183 : vector<1x32xf32>
    %185 = arith.negf %184 : vector<1x32xf32>
    %186 = math.exp %185 : vector<1x32xf32>
    %cst_36 = arith.constant 1.000000e+00 : f32
    %187 = vector.broadcast %cst_36 : f32 to vector<1x32xf32>
    %188 = arith.addf %187, %186 : vector<1x32xf32>
    %189 = arith.divf %187, %188 : vector<1x32xf32>
    %190 = vector.extract_strided_slice %8 {offsets = [6, 0], sizes = [1, 32], strides = [1, 1]} : vector<16x32xf32> to vector<1x32xf32>
    %191 = vector.extract_strided_slice %181 {offsets = [0, 32], sizes = [1, 32], strides = [1, 1]} : vector<1x96xf32> to vector<1x32xf32>
    %192 = arith.addf %190, %191 : vector<1x32xf32>
    %193 = arith.negf %192 : vector<1x32xf32>
    %194 = math.exp %193 : vector<1x32xf32>
    %cst_37 = arith.constant 1.000000e+00 : f32
    %195 = vector.broadcast %cst_37 : f32 to vector<1x32xf32>
    %196 = arith.addf %195, %194 : vector<1x32xf32>
    %197 = arith.divf %195, %196 : vector<1x32xf32>
    %198 = vector.extract_strided_slice %9 {offsets = [6, 0], sizes = [1, 32], strides = [1, 1]} : vector<16x32xf32> to vector<1x32xf32>
    %199 = vector.extract_strided_slice %181 {offsets = [0, 64], sizes = [1, 32], strides = [1, 1]} : vector<1x96xf32> to vector<1x32xf32>
    %200 = arith.addf %199, %11 : vector<1x32xf32>
    %201 = arith.mulf %189, %200 : vector<1x32xf32>
    %202 = arith.addf %198, %201 : vector<1x32xf32>
    %203 = math.tanh %202 : vector<1x32xf32>
    %cst_38 = arith.constant 1.000000e+00 : f32
    %204 = vector.broadcast %cst_38 : f32 to vector<1x32xf32>
    %205 = arith.subf %204, %197 : vector<1x32xf32>
    %206 = arith.mulf %205, %203 : vector<1x32xf32>
    %207 = arith.mulf %197, %180 : vector<1x32xf32>
    %208 = arith.addf %206, %207 : vector<1x32xf32>
    %cst_39 = arith.constant dense<0.000000e+00> : vector<1x96xf32>
    %209 = tpu.matmul %208, %10, %cst_39 {dimension_numbers = #tpu.dot_dimension_numbers<[1], [0], [0], [1], [0, 0, 1, 1], [], []>} : vector<1x32xf32>, vector<32x96xf32>, vector<1x96xf32> -> vector<1x96xf32>
    %210 = vector.extract_strided_slice %7 {offsets = [7, 0], sizes = [1, 32], strides = [1, 1]} : vector<16x32xf32> to vector<1x32xf32>
    %211 = vector.extract_strided_slice %209 {offsets = [0, 0], sizes = [1, 32], strides = [1, 1]} : vector<1x96xf32> to vector<1x32xf32>
    %212 = arith.addf %210, %211 : vector<1x32xf32>
    %213 = arith.negf %212 : vector<1x32xf32>
    %214 = math.exp %213 : vector<1x32xf32>
    %cst_40 = arith.constant 1.000000e+00 : f32
    %215 = vector.broadcast %cst_40 : f32 to vector<1x32xf32>
    %216 = arith.addf %215, %214 : vector<1x32xf32>
    %217 = arith.divf %215, %216 : vector<1x32xf32>
    %218 = vector.extract_strided_slice %8 {offsets = [7, 0], sizes = [1, 32], strides = [1, 1]} : vector<16x32xf32> to vector<1x32xf32>
    %219 = vector.extract_strided_slice %209 {offsets = [0, 32], sizes = [1, 32], strides = [1, 1]} : vector<1x96xf32> to vector<1x32xf32>
    %220 = arith.addf %218, %219 : vector<1x32xf32>
    %221 = arith.negf %220 : vector<1x32xf32>
    %222 = math.exp %221 : vector<1x32xf32>
    %cst_41 = arith.constant 1.000000e+00 : f32
    %223 = vector.broadcast %cst_41 : f32 to vector<1x32xf32>
    %224 = arith.addf %223, %222 : vector<1x32xf32>
    %225 = arith.divf %223, %224 : vector<1x32xf32>
    %226 = vector.extract_strided_slice %9 {offsets = [7, 0], sizes = [1, 32], strides = [1, 1]} : vector<16x32xf32> to vector<1x32xf32>
    %227 = vector.extract_strided_slice %209 {offsets = [0, 64], sizes = [1, 32], strides = [1, 1]} : vector<1x96xf32> to vector<1x32xf32>
    %228 = arith.addf %227, %11 : vector<1x32xf32>
    %229 = arith.mulf %217, %228 : vector<1x32xf32>
    %230 = arith.addf %226, %229 : vector<1x32xf32>
    %231 = math.tanh %230 : vector<1x32xf32>
    %cst_42 = arith.constant 1.000000e+00 : f32
    %232 = vector.broadcast %cst_42 : f32 to vector<1x32xf32>
    %233 = arith.subf %232, %225 : vector<1x32xf32>
    %234 = arith.mulf %233, %231 : vector<1x32xf32>
    %235 = arith.mulf %225, %208 : vector<1x32xf32>
    %236 = arith.addf %234, %235 : vector<1x32xf32>
    %cst_43 = arith.constant dense<0.000000e+00> : vector<1x96xf32>
    %237 = tpu.matmul %236, %10, %cst_43 {dimension_numbers = #tpu.dot_dimension_numbers<[1], [0], [0], [1], [0, 0, 1, 1], [], []>} : vector<1x32xf32>, vector<32x96xf32>, vector<1x96xf32> -> vector<1x96xf32>
    %238 = vector.extract_strided_slice %7 {offsets = [8, 0], sizes = [1, 32], strides = [1, 1]} : vector<16x32xf32> to vector<1x32xf32>
    %239 = vector.extract_strided_slice %237 {offsets = [0, 0], sizes = [1, 32], strides = [1, 1]} : vector<1x96xf32> to vector<1x32xf32>
    %240 = arith.addf %238, %239 : vector<1x32xf32>
    %241 = arith.negf %240 : vector<1x32xf32>
    %242 = math.exp %241 : vector<1x32xf32>
    %cst_44 = arith.constant 1.000000e+00 : f32
    %243 = vector.broadcast %cst_44 : f32 to vector<1x32xf32>
    %244 = arith.addf %243, %242 : vector<1x32xf32>
    %245 = arith.divf %243, %244 : vector<1x32xf32>
    %246 = vector.extract_strided_slice %8 {offsets = [8, 0], sizes = [1, 32], strides = [1, 1]} : vector<16x32xf32> to vector<1x32xf32>
    %247 = vector.extract_strided_slice %237 {offsets = [0, 32], sizes = [1, 32], strides = [1, 1]} : vector<1x96xf32> to vector<1x32xf32>
    %248 = arith.addf %246, %247 : vector<1x32xf32>
    %249 = arith.negf %248 : vector<1x32xf32>
    %250 = math.exp %249 : vector<1x32xf32>
    %cst_45 = arith.constant 1.000000e+00 : f32
    %251 = vector.broadcast %cst_45 : f32 to vector<1x32xf32>
    %252 = arith.addf %251, %250 : vector<1x32xf32>
    %253 = arith.divf %251, %252 : vector<1x32xf32>
    %254 = vector.extract_strided_slice %9 {offsets = [8, 0], sizes = [1, 32], strides = [1, 1]} : vector<16x32xf32> to vector<1x32xf32>
    %255 = vector.extract_strided_slice %237 {offsets = [0, 64], sizes = [1, 32], strides = [1, 1]} : vector<1x96xf32> to vector<1x32xf32>
    %256 = arith.addf %255, %11 : vector<1x32xf32>
    %257 = arith.mulf %245, %256 : vector<1x32xf32>
    %258 = arith.addf %254, %257 : vector<1x32xf32>
    %259 = math.tanh %258 : vector<1x32xf32>
    %cst_46 = arith.constant 1.000000e+00 : f32
    %260 = vector.broadcast %cst_46 : f32 to vector<1x32xf32>
    %261 = arith.subf %260, %253 : vector<1x32xf32>
    %262 = arith.mulf %261, %259 : vector<1x32xf32>
    %263 = arith.mulf %253, %236 : vector<1x32xf32>
    %264 = arith.addf %262, %263 : vector<1x32xf32>
    %cst_47 = arith.constant dense<0.000000e+00> : vector<1x96xf32>
    %265 = tpu.matmul %264, %10, %cst_47 {dimension_numbers = #tpu.dot_dimension_numbers<[1], [0], [0], [1], [0, 0, 1, 1], [], []>} : vector<1x32xf32>, vector<32x96xf32>, vector<1x96xf32> -> vector<1x96xf32>
    %266 = vector.extract_strided_slice %7 {offsets = [9, 0], sizes = [1, 32], strides = [1, 1]} : vector<16x32xf32> to vector<1x32xf32>
    %267 = vector.extract_strided_slice %265 {offsets = [0, 0], sizes = [1, 32], strides = [1, 1]} : vector<1x96xf32> to vector<1x32xf32>
    %268 = arith.addf %266, %267 : vector<1x32xf32>
    %269 = arith.negf %268 : vector<1x32xf32>
    %270 = math.exp %269 : vector<1x32xf32>
    %cst_48 = arith.constant 1.000000e+00 : f32
    %271 = vector.broadcast %cst_48 : f32 to vector<1x32xf32>
    %272 = arith.addf %271, %270 : vector<1x32xf32>
    %273 = arith.divf %271, %272 : vector<1x32xf32>
    %274 = vector.extract_strided_slice %8 {offsets = [9, 0], sizes = [1, 32], strides = [1, 1]} : vector<16x32xf32> to vector<1x32xf32>
    %275 = vector.extract_strided_slice %265 {offsets = [0, 32], sizes = [1, 32], strides = [1, 1]} : vector<1x96xf32> to vector<1x32xf32>
    %276 = arith.addf %274, %275 : vector<1x32xf32>
    %277 = arith.negf %276 : vector<1x32xf32>
    %278 = math.exp %277 : vector<1x32xf32>
    %cst_49 = arith.constant 1.000000e+00 : f32
    %279 = vector.broadcast %cst_49 : f32 to vector<1x32xf32>
    %280 = arith.addf %279, %278 : vector<1x32xf32>
    %281 = arith.divf %279, %280 : vector<1x32xf32>
    %282 = vector.extract_strided_slice %9 {offsets = [9, 0], sizes = [1, 32], strides = [1, 1]} : vector<16x32xf32> to vector<1x32xf32>
    %283 = vector.extract_strided_slice %265 {offsets = [0, 64], sizes = [1, 32], strides = [1, 1]} : vector<1x96xf32> to vector<1x32xf32>
    %284 = arith.addf %283, %11 : vector<1x32xf32>
    %285 = arith.mulf %273, %284 : vector<1x32xf32>
    %286 = arith.addf %282, %285 : vector<1x32xf32>
    %287 = math.tanh %286 : vector<1x32xf32>
    %cst_50 = arith.constant 1.000000e+00 : f32
    %288 = vector.broadcast %cst_50 : f32 to vector<1x32xf32>
    %289 = arith.subf %288, %281 : vector<1x32xf32>
    %290 = arith.mulf %289, %287 : vector<1x32xf32>
    %291 = arith.mulf %281, %264 : vector<1x32xf32>
    %292 = arith.addf %290, %291 : vector<1x32xf32>
    %cst_51 = arith.constant dense<0.000000e+00> : vector<1x96xf32>
    %293 = tpu.matmul %292, %10, %cst_51 {dimension_numbers = #tpu.dot_dimension_numbers<[1], [0], [0], [1], [0, 0, 1, 1], [], []>} : vector<1x32xf32>, vector<32x96xf32>, vector<1x96xf32> -> vector<1x96xf32>
    %294 = vector.extract_strided_slice %7 {offsets = [10, 0], sizes = [1, 32], strides = [1, 1]} : vector<16x32xf32> to vector<1x32xf32>
    %295 = vector.extract_strided_slice %293 {offsets = [0, 0], sizes = [1, 32], strides = [1, 1]} : vector<1x96xf32> to vector<1x32xf32>
    %296 = arith.addf %294, %295 : vector<1x32xf32>
    %297 = arith.negf %296 : vector<1x32xf32>
    %298 = math.exp %297 : vector<1x32xf32>
    %cst_52 = arith.constant 1.000000e+00 : f32
    %299 = vector.broadcast %cst_52 : f32 to vector<1x32xf32>
    %300 = arith.addf %299, %298 : vector<1x32xf32>
    %301 = arith.divf %299, %300 : vector<1x32xf32>
    %302 = vector.extract_strided_slice %8 {offsets = [10, 0], sizes = [1, 32], strides = [1, 1]} : vector<16x32xf32> to vector<1x32xf32>
    %303 = vector.extract_strided_slice %293 {offsets = [0, 32], sizes = [1, 32], strides = [1, 1]} : vector<1x96xf32> to vector<1x32xf32>
    %304 = arith.addf %302, %303 : vector<1x32xf32>
    %305 = arith.negf %304 : vector<1x32xf32>
    %306 = math.exp %305 : vector<1x32xf32>
    %cst_53 = arith.constant 1.000000e+00 : f32
    %307 = vector.broadcast %cst_53 : f32 to vector<1x32xf32>
    %308 = arith.addf %307, %306 : vector<1x32xf32>
    %309 = arith.divf %307, %308 : vector<1x32xf32>
    %310 = vector.extract_strided_slice %9 {offsets = [10, 0], sizes = [1, 32], strides = [1, 1]} : vector<16x32xf32> to vector<1x32xf32>
    %311 = vector.extract_strided_slice %293 {offsets = [0, 64], sizes = [1, 32], strides = [1, 1]} : vector<1x96xf32> to vector<1x32xf32>
    %312 = arith.addf %311, %11 : vector<1x32xf32>
    %313 = arith.mulf %301, %312 : vector<1x32xf32>
    %314 = arith.addf %310, %313 : vector<1x32xf32>
    %315 = math.tanh %314 : vector<1x32xf32>
    %cst_54 = arith.constant 1.000000e+00 : f32
    %316 = vector.broadcast %cst_54 : f32 to vector<1x32xf32>
    %317 = arith.subf %316, %309 : vector<1x32xf32>
    %318 = arith.mulf %317, %315 : vector<1x32xf32>
    %319 = arith.mulf %309, %292 : vector<1x32xf32>
    %320 = arith.addf %318, %319 : vector<1x32xf32>
    %cst_55 = arith.constant dense<0.000000e+00> : vector<1x96xf32>
    %321 = tpu.matmul %320, %10, %cst_55 {dimension_numbers = #tpu.dot_dimension_numbers<[1], [0], [0], [1], [0, 0, 1, 1], [], []>} : vector<1x32xf32>, vector<32x96xf32>, vector<1x96xf32> -> vector<1x96xf32>
    %322 = vector.extract_strided_slice %7 {offsets = [11, 0], sizes = [1, 32], strides = [1, 1]} : vector<16x32xf32> to vector<1x32xf32>
    %323 = vector.extract_strided_slice %321 {offsets = [0, 0], sizes = [1, 32], strides = [1, 1]} : vector<1x96xf32> to vector<1x32xf32>
    %324 = arith.addf %322, %323 : vector<1x32xf32>
    %325 = arith.negf %324 : vector<1x32xf32>
    %326 = math.exp %325 : vector<1x32xf32>
    %cst_56 = arith.constant 1.000000e+00 : f32
    %327 = vector.broadcast %cst_56 : f32 to vector<1x32xf32>
    %328 = arith.addf %327, %326 : vector<1x32xf32>
    %329 = arith.divf %327, %328 : vector<1x32xf32>
    %330 = vector.extract_strided_slice %8 {offsets = [11, 0], sizes = [1, 32], strides = [1, 1]} : vector<16x32xf32> to vector<1x32xf32>
    %331 = vector.extract_strided_slice %321 {offsets = [0, 32], sizes = [1, 32], strides = [1, 1]} : vector<1x96xf32> to vector<1x32xf32>
    %332 = arith.addf %330, %331 : vector<1x32xf32>
    %333 = arith.negf %332 : vector<1x32xf32>
    %334 = math.exp %333 : vector<1x32xf32>
    %cst_57 = arith.constant 1.000000e+00 : f32
    %335 = vector.broadcast %cst_57 : f32 to vector<1x32xf32>
    %336 = arith.addf %335, %334 : vector<1x32xf32>
    %337 = arith.divf %335, %336 : vector<1x32xf32>
    %338 = vector.extract_strided_slice %9 {offsets = [11, 0], sizes = [1, 32], strides = [1, 1]} : vector<16x32xf32> to vector<1x32xf32>
    %339 = vector.extract_strided_slice %321 {offsets = [0, 64], sizes = [1, 32], strides = [1, 1]} : vector<1x96xf32> to vector<1x32xf32>
    %340 = arith.addf %339, %11 : vector<1x32xf32>
    %341 = arith.mulf %329, %340 : vector<1x32xf32>
    %342 = arith.addf %338, %341 : vector<1x32xf32>
    %343 = math.tanh %342 : vector<1x32xf32>
    %cst_58 = arith.constant 1.000000e+00 : f32
    %344 = vector.broadcast %cst_58 : f32 to vector<1x32xf32>
    %345 = arith.subf %344, %337 : vector<1x32xf32>
    %346 = arith.mulf %345, %343 : vector<1x32xf32>
    %347 = arith.mulf %337, %320 : vector<1x32xf32>
    %348 = arith.addf %346, %347 : vector<1x32xf32>
    %cst_59 = arith.constant dense<0.000000e+00> : vector<1x96xf32>
    %349 = tpu.matmul %348, %10, %cst_59 {dimension_numbers = #tpu.dot_dimension_numbers<[1], [0], [0], [1], [0, 0, 1, 1], [], []>} : vector<1x32xf32>, vector<32x96xf32>, vector<1x96xf32> -> vector<1x96xf32>
    %350 = vector.extract_strided_slice %7 {offsets = [12, 0], sizes = [1, 32], strides = [1, 1]} : vector<16x32xf32> to vector<1x32xf32>
    %351 = vector.extract_strided_slice %349 {offsets = [0, 0], sizes = [1, 32], strides = [1, 1]} : vector<1x96xf32> to vector<1x32xf32>
    %352 = arith.addf %350, %351 : vector<1x32xf32>
    %353 = arith.negf %352 : vector<1x32xf32>
    %354 = math.exp %353 : vector<1x32xf32>
    %cst_60 = arith.constant 1.000000e+00 : f32
    %355 = vector.broadcast %cst_60 : f32 to vector<1x32xf32>
    %356 = arith.addf %355, %354 : vector<1x32xf32>
    %357 = arith.divf %355, %356 : vector<1x32xf32>
    %358 = vector.extract_strided_slice %8 {offsets = [12, 0], sizes = [1, 32], strides = [1, 1]} : vector<16x32xf32> to vector<1x32xf32>
    %359 = vector.extract_strided_slice %349 {offsets = [0, 32], sizes = [1, 32], strides = [1, 1]} : vector<1x96xf32> to vector<1x32xf32>
    %360 = arith.addf %358, %359 : vector<1x32xf32>
    %361 = arith.negf %360 : vector<1x32xf32>
    %362 = math.exp %361 : vector<1x32xf32>
    %cst_61 = arith.constant 1.000000e+00 : f32
    %363 = vector.broadcast %cst_61 : f32 to vector<1x32xf32>
    %364 = arith.addf %363, %362 : vector<1x32xf32>
    %365 = arith.divf %363, %364 : vector<1x32xf32>
    %366 = vector.extract_strided_slice %9 {offsets = [12, 0], sizes = [1, 32], strides = [1, 1]} : vector<16x32xf32> to vector<1x32xf32>
    %367 = vector.extract_strided_slice %349 {offsets = [0, 64], sizes = [1, 32], strides = [1, 1]} : vector<1x96xf32> to vector<1x32xf32>
    %368 = arith.addf %367, %11 : vector<1x32xf32>
    %369 = arith.mulf %357, %368 : vector<1x32xf32>
    %370 = arith.addf %366, %369 : vector<1x32xf32>
    %371 = math.tanh %370 : vector<1x32xf32>
    %cst_62 = arith.constant 1.000000e+00 : f32
    %372 = vector.broadcast %cst_62 : f32 to vector<1x32xf32>
    %373 = arith.subf %372, %365 : vector<1x32xf32>
    %374 = arith.mulf %373, %371 : vector<1x32xf32>
    %375 = arith.mulf %365, %348 : vector<1x32xf32>
    %376 = arith.addf %374, %375 : vector<1x32xf32>
    %cst_63 = arith.constant dense<0.000000e+00> : vector<1x96xf32>
    %377 = tpu.matmul %376, %10, %cst_63 {dimension_numbers = #tpu.dot_dimension_numbers<[1], [0], [0], [1], [0, 0, 1, 1], [], []>} : vector<1x32xf32>, vector<32x96xf32>, vector<1x96xf32> -> vector<1x96xf32>
    %378 = vector.extract_strided_slice %7 {offsets = [13, 0], sizes = [1, 32], strides = [1, 1]} : vector<16x32xf32> to vector<1x32xf32>
    %379 = vector.extract_strided_slice %377 {offsets = [0, 0], sizes = [1, 32], strides = [1, 1]} : vector<1x96xf32> to vector<1x32xf32>
    %380 = arith.addf %378, %379 : vector<1x32xf32>
    %381 = arith.negf %380 : vector<1x32xf32>
    %382 = math.exp %381 : vector<1x32xf32>
    %cst_64 = arith.constant 1.000000e+00 : f32
    %383 = vector.broadcast %cst_64 : f32 to vector<1x32xf32>
    %384 = arith.addf %383, %382 : vector<1x32xf32>
    %385 = arith.divf %383, %384 : vector<1x32xf32>
    %386 = vector.extract_strided_slice %8 {offsets = [13, 0], sizes = [1, 32], strides = [1, 1]} : vector<16x32xf32> to vector<1x32xf32>
    %387 = vector.extract_strided_slice %377 {offsets = [0, 32], sizes = [1, 32], strides = [1, 1]} : vector<1x96xf32> to vector<1x32xf32>
    %388 = arith.addf %386, %387 : vector<1x32xf32>
    %389 = arith.negf %388 : vector<1x32xf32>
    %390 = math.exp %389 : vector<1x32xf32>
    %cst_65 = arith.constant 1.000000e+00 : f32
    %391 = vector.broadcast %cst_65 : f32 to vector<1x32xf32>
    %392 = arith.addf %391, %390 : vector<1x32xf32>
    %393 = arith.divf %391, %392 : vector<1x32xf32>
    %394 = vector.extract_strided_slice %9 {offsets = [13, 0], sizes = [1, 32], strides = [1, 1]} : vector<16x32xf32> to vector<1x32xf32>
    %395 = vector.extract_strided_slice %377 {offsets = [0, 64], sizes = [1, 32], strides = [1, 1]} : vector<1x96xf32> to vector<1x32xf32>
    %396 = arith.addf %395, %11 : vector<1x32xf32>
    %397 = arith.mulf %385, %396 : vector<1x32xf32>
    %398 = arith.addf %394, %397 : vector<1x32xf32>
    %399 = math.tanh %398 : vector<1x32xf32>
    %cst_66 = arith.constant 1.000000e+00 : f32
    %400 = vector.broadcast %cst_66 : f32 to vector<1x32xf32>
    %401 = arith.subf %400, %393 : vector<1x32xf32>
    %402 = arith.mulf %401, %399 : vector<1x32xf32>
    %403 = arith.mulf %393, %376 : vector<1x32xf32>
    %404 = arith.addf %402, %403 : vector<1x32xf32>
    %cst_67 = arith.constant dense<0.000000e+00> : vector<1x96xf32>
    %405 = tpu.matmul %404, %10, %cst_67 {dimension_numbers = #tpu.dot_dimension_numbers<[1], [0], [0], [1], [0, 0, 1, 1], [], []>} : vector<1x32xf32>, vector<32x96xf32>, vector<1x96xf32> -> vector<1x96xf32>
    %406 = vector.extract_strided_slice %7 {offsets = [14, 0], sizes = [1, 32], strides = [1, 1]} : vector<16x32xf32> to vector<1x32xf32>
    %407 = vector.extract_strided_slice %405 {offsets = [0, 0], sizes = [1, 32], strides = [1, 1]} : vector<1x96xf32> to vector<1x32xf32>
    %408 = arith.addf %406, %407 : vector<1x32xf32>
    %409 = arith.negf %408 : vector<1x32xf32>
    %410 = math.exp %409 : vector<1x32xf32>
    %cst_68 = arith.constant 1.000000e+00 : f32
    %411 = vector.broadcast %cst_68 : f32 to vector<1x32xf32>
    %412 = arith.addf %411, %410 : vector<1x32xf32>
    %413 = arith.divf %411, %412 : vector<1x32xf32>
    %414 = vector.extract_strided_slice %8 {offsets = [14, 0], sizes = [1, 32], strides = [1, 1]} : vector<16x32xf32> to vector<1x32xf32>
    %415 = vector.extract_strided_slice %405 {offsets = [0, 32], sizes = [1, 32], strides = [1, 1]} : vector<1x96xf32> to vector<1x32xf32>
    %416 = arith.addf %414, %415 : vector<1x32xf32>
    %417 = arith.negf %416 : vector<1x32xf32>
    %418 = math.exp %417 : vector<1x32xf32>
    %cst_69 = arith.constant 1.000000e+00 : f32
    %419 = vector.broadcast %cst_69 : f32 to vector<1x32xf32>
    %420 = arith.addf %419, %418 : vector<1x32xf32>
    %421 = arith.divf %419, %420 : vector<1x32xf32>
    %422 = vector.extract_strided_slice %9 {offsets = [14, 0], sizes = [1, 32], strides = [1, 1]} : vector<16x32xf32> to vector<1x32xf32>
    %423 = vector.extract_strided_slice %405 {offsets = [0, 64], sizes = [1, 32], strides = [1, 1]} : vector<1x96xf32> to vector<1x32xf32>
    %424 = arith.addf %423, %11 : vector<1x32xf32>
    %425 = arith.mulf %413, %424 : vector<1x32xf32>
    %426 = arith.addf %422, %425 : vector<1x32xf32>
    %427 = math.tanh %426 : vector<1x32xf32>
    %cst_70 = arith.constant 1.000000e+00 : f32
    %428 = vector.broadcast %cst_70 : f32 to vector<1x32xf32>
    %429 = arith.subf %428, %421 : vector<1x32xf32>
    %430 = arith.mulf %429, %427 : vector<1x32xf32>
    %431 = arith.mulf %421, %404 : vector<1x32xf32>
    %432 = arith.addf %430, %431 : vector<1x32xf32>
    %cst_71 = arith.constant dense<0.000000e+00> : vector<1x96xf32>
    %433 = tpu.matmul %432, %10, %cst_71 {dimension_numbers = #tpu.dot_dimension_numbers<[1], [0], [0], [1], [0, 0, 1, 1], [], []>} : vector<1x32xf32>, vector<32x96xf32>, vector<1x96xf32> -> vector<1x96xf32>
    %434 = vector.extract_strided_slice %7 {offsets = [15, 0], sizes = [1, 32], strides = [1, 1]} : vector<16x32xf32> to vector<1x32xf32>
    %435 = vector.extract_strided_slice %433 {offsets = [0, 0], sizes = [1, 32], strides = [1, 1]} : vector<1x96xf32> to vector<1x32xf32>
    %436 = arith.addf %434, %435 : vector<1x32xf32>
    %437 = arith.negf %436 : vector<1x32xf32>
    %438 = math.exp %437 : vector<1x32xf32>
    %cst_72 = arith.constant 1.000000e+00 : f32
    %439 = vector.broadcast %cst_72 : f32 to vector<1x32xf32>
    %440 = arith.addf %439, %438 : vector<1x32xf32>
    %441 = arith.divf %439, %440 : vector<1x32xf32>
    %442 = vector.extract_strided_slice %8 {offsets = [15, 0], sizes = [1, 32], strides = [1, 1]} : vector<16x32xf32> to vector<1x32xf32>
    %443 = vector.extract_strided_slice %433 {offsets = [0, 32], sizes = [1, 32], strides = [1, 1]} : vector<1x96xf32> to vector<1x32xf32>
    %444 = arith.addf %442, %443 : vector<1x32xf32>
    %445 = arith.negf %444 : vector<1x32xf32>
    %446 = math.exp %445 : vector<1x32xf32>
    %cst_73 = arith.constant 1.000000e+00 : f32
    %447 = vector.broadcast %cst_73 : f32 to vector<1x32xf32>
    %448 = arith.addf %447, %446 : vector<1x32xf32>
    %449 = arith.divf %447, %448 : vector<1x32xf32>
    %450 = vector.extract_strided_slice %9 {offsets = [15, 0], sizes = [1, 32], strides = [1, 1]} : vector<16x32xf32> to vector<1x32xf32>
    %451 = vector.extract_strided_slice %433 {offsets = [0, 64], sizes = [1, 32], strides = [1, 1]} : vector<1x96xf32> to vector<1x32xf32>
    %452 = arith.addf %451, %11 : vector<1x32xf32>
    %453 = arith.mulf %441, %452 : vector<1x32xf32>
    %454 = arith.addf %450, %453 : vector<1x32xf32>
    %455 = math.tanh %454 : vector<1x32xf32>
    %cst_74 = arith.constant 1.000000e+00 : f32
    %456 = vector.broadcast %cst_74 : f32 to vector<1x32xf32>
    %457 = arith.subf %456, %449 : vector<1x32xf32>
    %458 = arith.mulf %457, %455 : vector<1x32xf32>
    %459 = arith.mulf %449, %432 : vector<1x32xf32>
    %460 = arith.addf %458, %459 : vector<1x32xf32>
    %461 = tpu.concatenate %40, %68, %96, %124, %152, %180, %208, %236, %264, %292, %320, %348, %376, %404, %432, %460 in 0 : vector<1x32xf32>, vector<1x32xf32>, vector<1x32xf32>, vector<1x32xf32>, vector<1x32xf32>, vector<1x32xf32>, vector<1x32xf32>, vector<1x32xf32>, vector<1x32xf32>, vector<1x32xf32>, vector<1x32xf32>, vector<1x32xf32>, vector<1x32xf32>, vector<1x32xf32>, vector<1x32xf32>, vector<1x32xf32> -> vector<16x32xf32>
    %c0_75 = arith.constant 0 : index
    %c0_76 = arith.constant 0 : index
    %462 = vector.load %arg6[%c0_75, %c0_76] : memref<32x8xf32, #tpu.memory_space<vmem>>, vector<32x8xf32>
    %cst_77 = arith.constant dense<0.000000e+00> : vector<16x8xf32>
    %463 = tpu.matmul %461, %462, %cst_77 {dimension_numbers = #tpu.dot_dimension_numbers<[1], [0], [0], [1], [0, 0, 1, 1], [], []>} : vector<16x32xf32>, vector<32x8xf32>, vector<16x8xf32> -> vector<16x8xf32>
    %c0_78 = arith.constant 0 : index
    %c0_79 = arith.constant 0 : index
    %464 = vector.load %arg7[%c0_78, %c0_79] : memref<1x8xf32, #tpu.memory_space<vmem>>, vector<1x8xf32>
    %465 = vector.broadcast %464 : vector<1x8xf32> to vector<16x8xf32>
    %466 = arith.addf %463, %465 : vector<16x8xf32>
    %cst_80 = arith.constant 0.000000e+00 : f32
    %467 = vector.broadcast %cst_80 : f32 to vector<16x8xf32>
    %468 = arith.cmpf ogt, %466, %467 : vector<16x8xf32>
    %cst_81 = arith.constant 0.00999999977 : f32
    %469 = vector.broadcast %cst_81 : f32 to vector<16x8xf32>
    %470 = arith.mulf %469, %466 : vector<16x8xf32>
    %471 = arith.select %468, %466, %470 : vector<16x8xi1>, vector<16x8xf32>
    %c0_82 = arith.constant 0 : index
    %c0_83 = arith.constant 0 : index
    %c0_84 = arith.constant 0 : index
    %472 = vector.load %arg8[%c0_82, %c0_83, %c0_84] : memref<1x16x8xf32, #tpu.memory_space<vmem>>, vector<1x16x8xf32>
    %473 = vector.shape_cast %472 : vector<1x16x8xf32> to vector<16x8xf32>
    %474 = vector.shape_cast %471 : vector<16x8xf32> to vector<1x16x8xf32>
    tpu.vector_store %arg8[%c0_82, %c0_83, %c0_84], %474 {strides = array<i32>} : memref<1x16x8xf32, #tpu.memory_space<vmem>>, vector<1x16x8xf32>,
    return
  }
  func.func @transform_0(%arg0: i32) -> (i32, i32, i32) {
    %c0_i32 = arith.constant 0 : i32
    %c0_i32_0 = arith.constant 0 : i32
    %c0_i32_1 = arith.constant 0 : i32
    return %arg0, %c0_i32, %c0_i32_0 : i32, i32, i32
  }
  func.func @transform_1(%arg0: i32) -> (i32, i32) {
    %c0_i32 = arith.constant 0 : i32
    %c0_i32_0 = arith.constant 0 : i32
    %c0_i32_1 = arith.constant 0 : i32
    return %c0_i32, %c0_i32_0 : i32, i32
  }
  func.func @transform_2(%arg0: i32) -> (i32, i32) {
    %c0_i32 = arith.constant 0 : i32
    %c0_i32_0 = arith.constant 0 : i32
    %c0_i32_1 = arith.constant 0 : i32
    return %c0_i32, %c0_i32_0 : i32, i32
  }
  func.func @transform_3(%arg0: i32) -> (i32, i32) {
    %c0_i32 = arith.constant 0 : i32
    %c0_i32_0 = arith.constant 0 : i32
    %c0_i32_1 = arith.constant 0 : i32
    return %c0_i32, %c0_i32_0 : i32, i32
  }
  func.func @transform_4(%arg0: i32) -> (i32, i32) {
    %c0_i32 = arith.constant 0 : i32
    %c0_i32_0 = arith.constant 0 : i32
    %c0_i32_1 = arith.constant 0 : i32
    return %c0_i32, %c0_i32_0 : i32, i32
  }
  func.func @transform_5(%arg0: i32) -> (i32, i32) {
    %c0_i32 = arith.constant 0 : i32
    %c0_i32_0 = arith.constant 0 : i32
    %c0_i32_1 = arith.constant 0 : i32
    return %c0_i32, %c0_i32_0 : i32, i32
  }
  func.func @transform_6(%arg0: i32) -> (i32, i32) {
    %c0_i32 = arith.constant 0 : i32
    %c0_i32_0 = arith.constant 0 : i32
    %c0_i32_1 = arith.constant 0 : i32
    return %c0_i32, %c0_i32_0 : i32, i32
  }
  func.func @transform_7(%arg0: i32) -> (i32, i32, i32) {
    %c0_i32 = arith.constant 0 : i32
    %c0_i32_0 = arith.constant 0 : i32
    %c0_i32_1 = arith.constant 0 : i32
    return %arg0, %c0_i32, %c0_i32_0 : i32, i32, i32
  }
}

</mosaic_0001>

<llo_original>
// kernel: tpu_custom_call.1
$region0: #{tpu_custom_call.1}
  #allocation0 [shape = 'u32[]', space=smem, size = 0x4, offset = 0x4, fixed_abs, tag = 'smem constant byte address 0x4 - core index']
  #allocation1 [shape = 'u32[144,128]{1,0:T(1,128)}', space=vmem, size = 0x12000, scoped, tag = 'internal scratch']
  %s0 = inlined_call_operand.vmem [shape: f32[2,16,32], index: 0, kind: input, shape index: {}]
  %s1 = inlined_call_operand.hbm [shape: f32[32,96], index: 1, kind: input, shape index: {}]
  %s2 = inlined_call_operand.hbm [shape: f32[32,96], index: 2, kind: input, shape index: {}]
  %s3 = inlined_call_operand.vmem [shape: f32[1,96], index: 3, kind: input, shape index: {}]
  %s4 = inlined_call_operand.vmem [shape: f32[1,32], index: 4, kind: input, shape index: {}]
  %s5 = inlined_call_operand.vmem [shape: f32[32,8], index: 5, kind: input, shape index: {}]
  %s6 = inlined_call_operand.vmem [shape: f32[1,8], index: 6, kind: input, shape index: {}]
  %s7 = inlined_call_operand.vmem [shape: f32[2,16,8], index: 7, kind: output, shape index: {}]
  %s8 = sld [smem:[#allocation0]]
  $region69: #{tpu_custom_call.1} parent=0
    _
  %s10 = ssub.s32 1, %s8
  %s11 = scalar_select 0, %s10, %s8
  $region1: #{tpu_custom_call.1} parent=0
    #allocation2 [shape = 'u8[16384]{0}', space=vmem, size = 0x4000, scoped, tag = 'input window, operand 1, single buffered']
    #allocation3 [shape = 's32[2]{0}', space=sflag, size = 0x8, scoped, tag = 'scoped memory for tpu_custom_call.1']
    #allocation4 [shape = 'u8[16384]{0}', space=vmem, size = 0x4000, scoped, tag = 'input window, operand 2, single buffered']
    #allocation5 [shape = 's32[1]{0}', space=sflag, size = 0x4, scoped, tag = 'scoped memory for tpu_custom_call.1']
    %12 = vsyncpa [#allocation3], 0
    %13 = vsyncpa [#allocation5], 0
    loop: start=0, step=1, limit=4
    $region2: #{tpu_custom_call.1} parent=1 // loop_pre_header
      _
    $region3: #{tpu_custom_call.1} parent=1 // loop_header
      %s15 = sphi 0, %s19
      %p16 = scmp.ge.s32.totalorder %s15, 4
      %s25 = sphi 0, %s27
      %s28 = sphi 0, %s25
      %s29 = sphi 0, %s28
      %s45 = sphi 0, %s29
      %s49 = sphi 0, %s49
      %s51 = sphi 0, %s49
      %s52 = sphi 0, %s51
      %s66 = sphi 0, %s52
      %s70 = sphi 0, %s70
      %s72 = sphi 0, %s70
      %s73 = sphi 0, %s72
      %s87 = sphi 0, %s73
      %s91 = sphi 0, %s91
      %s93 = sphi 0, %s91
      %s94 = sphi 0, %s93
      %s108 = sphi 0, %s94
      %s112 = sphi 0, %s112
      %s114 = sphi 0, %s112
      %s115 = sphi 0, %s114
      %s129 = sphi 0, %s115
      %s133 = sphi 0, %s133
      %s135 = sphi 0, %s133
      %s136 = sphi 0, %s135
      %s150 = sphi 0, %s136
      %s154 = sphi 0, %s154
      %s156 = sphi 0, %s154
      %s157 = sphi 0, %s156
      %s171 = sphi 0, %s157
      %s177 = sphi 0, %s179
      %s180 = sphi 0, %s177
      %s181 = sphi 0, %s180
      %s197 = sphi 0, %s181
    $region4: #{tpu_custom_call.1} parent=1 // loop_header_branch
      %18 = sbr.rel (%p16) target = $region8
    $region5: #{tpu_custom_call.1} parent=1 // loop_body
      %s20 = ssub.s32 %s15, 1
      %s21 = ssub.s32 %s15, 2
      %s22 = sadd.s32 %s15, 1
      %s23 = ssub.s32 %s15, %s22
      %p24 = scmp.eq.s32.totalorder %s23, 0
      %s26 = sadd.s32 %s25, 1
      %s27 = scalar_select %p24, %s25, %s26
      %p30 = pneg %p24
      %p31 = scmp.eq.s32.totalorder %s15, 1
      %p32 = por %p30, %p31
      %p33 = scmp.ne.s32.totalorder %s25, %s28
      %p34 = scmp.eq.s32.totalorder %s15, 0
      %p35 = por %p33, %p34
      %p36 = scmp.ne.s32.totalorder %s25, %s28
      %p37 = scmp.eq.s32.totalorder %s20, 1
      %p38 = por %p36, %p37
      %p39 = scmp.ne.s32.totalorder %s28, %s29
      %p40 = scmp.eq.s32.totalorder %s20, 0
      %p41 = por %p39, %p40
      %p42 = scmp.ne.s32.totalorder %s28, %s29
      %p43 = scmp.eq.s32.totalorder %s21, 1
      %p44 = por %p42, %p43
      %p46 = scmp.ne.s32.totalorder %s29, %s45
      %p47 = scmp.eq.s32.totalorder %s21, 0
      %p48 = por %p46, %p47
      %s50 = sadd.s32 %s49, 1
      %p53 = scmp.eq.s32.totalorder %s15, 1
      %p54 = scmp.ne.s32.totalorder %s49, %s51
      %p55 = scmp.eq.s32.totalorder %s15, 0
      %p56 = por %p54, %p55
      %p57 = scmp.ne.s32.totalorder %s49, %s51
      %p58 = scmp.eq.s32.totalorder %s20, 1
      %p59 = por %p57, %p58
      %p60 = scmp.ne.s32.totalorder %s51, %s52
      %p61 = scmp.eq.s32.totalorder %s20, 0
      %p62 = por %p60, %p61
      %p63 = scmp.ne.s32.totalorder %s51, %s52
      %p64 = scmp.eq.s32.totalorder %s21, 1
      %p65 = por %p63, %p64
      %p67 = scmp.ne.s32.totalorder %s52, %s66
      %p68 = scmp.eq.s32.totalorder %s21, 0
      %p69 = por %p67, %p68
      %s71 = sadd.s32 %s70, 1
      %p74 = scmp.eq.s32.totalorder %s15, 1
      %p75 = scmp.ne.s32.totalorder %s70, %s72
      %p76 = scmp.eq.s32.totalorder %s15, 0
      %p77 = por %p75, %p76
      %p78 = scmp.ne.s32.totalorder %s70, %s72
      %p79 = scmp.eq.s32.totalorder %s20, 1
      %p80 = por %p78, %p79
      %p81 = scmp.ne.s32.totalorder %s72, %s73
      %p82 = scmp.eq.s32.totalorder %s20, 0
      %p83 = por %p81, %p82
      %p84 = scmp.ne.s32.totalorder %s72, %s73
      %p85 = scmp.eq.s32.totalorder %s21, 1
      %p86 = por %p84, %p85
      %p88 = scmp.ne.s32.totalorder %s73, %s87
      %p89 = scmp.eq.s32.totalorder %s21, 0
      %p90 = por %p88, %p89
      %s92 = sadd.s32 %s91, 1
      %p95 = scmp.eq.s32.totalorder %s15, 1
      %p96 = scmp.ne.s32.totalorder %s91, %s93
      %p97 = scmp.eq.s32.totalorder %s15, 0
      %p98 = por %p96, %p97
      %p99 = scmp.ne.s32.totalorder %s91, %s93
      %p100 = scmp.eq.s32.totalorder %s20, 1
      %p101 = por %p99, %p100
      %p102 = scmp.ne.s32.totalorder %s93, %s94
      %p103 = scmp.eq.s32.totalorder %s20, 0
      %p104 = por %p102, %p103
      %p105 = scmp.ne.s32.totalorder %s93, %s94
      %p106 = scmp.eq.s32.totalorder %s21, 1
      %p107 = por %p105, %p106
      %p109 = scmp.ne.s32.totalorder %s94, %s108
      %p110 = scmp.eq.s32.totalorder %s21, 0
      %p111 = por %p109, %p110
      %s113 = sadd.s32 %s112, 1
      %p116 = scmp.eq.s32.totalorder %s15, 1
      %p117 = scmp.ne.s32.totalorder %s112, %s114
      %p118 = scmp.eq.s32.totalorder %s15, 0
      %p119 = por %p117, %p118
      %p120 = scmp.ne.s32.totalorder %s112, %s114
      %p121 = scmp.eq.s32.totalorder %s20, 1
      %p122 = por %p120, %p121
      %p123 = scmp.ne.s32.totalorder %s114, %s115
      %p124 = scmp.eq.s32.totalorder %s20, 0
      %p125 = por %p123, %p124
      %p126 = scmp.ne.s32.totalorder %s114, %s115
      %p127 = scmp.eq.s32.totalorder %s21, 1
      %p128 = por %p126, %p127
      %p130 = scmp.ne.s32.totalorder %s115, %s129
      %p131 = scmp.eq.s32.totalorder %s21, 0
      %p132 = por %p130, %p131
      %s134 = sadd.s32 %s133, 1
      %p137 = scmp.eq.s32.totalorder %s15, 1
      %p138 = scmp.ne.s32.totalorder %s133, %s135
      %p139 = scmp.eq.s32.totalorder %s15, 0
      %p140 = por %p138, %p139
      %p141 = scmp.ne.s32.totalorder %s133, %s135
      %p142 = scmp.eq.s32.totalorder %s20, 1
      %p143 = por %p141, %p142
      %p144 = scmp.ne.s32.totalorder %s135, %s136
      %p145 = scmp.eq.s32.totalorder %s20, 0
      %p146 = por %p144, %p145
      %p147 = scmp.ne.s32.totalorder %s135, %s136
      %p148 = scmp.eq.s32.totalorder %s21, 1
      %p149 = por %p147, %p148
      %p151 = scmp.ne.s32.totalorder %s136, %s150
      %p152 = scmp.eq.s32.totalorder %s21, 0
      %p153 = por %p151, %p152
      %s155 = sadd.s32 %s154, 1
      %p158 = scmp.eq.s32.totalorder %s15, 1
      %p159 = scmp.ne.s32.totalorder %s154, %s156
      %p160 = scmp.eq.s32.totalorder %s15, 0
      %p161 = por %p159, %p160
      %p162 = scmp.ne.s32.totalorder %s154, %s156
      %p163 = scmp.eq.s32.totalorder %s20, 1
      %p164 = por %p162, %p163
      %p165 = scmp.ne.s32.totalorder %s156, %s157
      %p166 = scmp.eq.s32.totalorder %s20, 0
      %p167 = por %p165, %p166
      %p168 = scmp.ne.s32.totalorder %s156, %s157
      %p169 = scmp.eq.s32.totalorder %s21, 1
      %p170 = por %p168, %p169
      %p172 = scmp.ne.s32.totalorder %s157, %s171
      %p173 = scmp.eq.s32.totalorder %s21, 0
      %p174 = por %p172, %p173
      %s175 = ssub.s32 %s15, %s22
      %p176 = scmp.eq.s32.totalorder %s175, 0
      %s178 = sadd.s32 %s177, 1
      %s179 = scalar_select %p176, %s177, %s178
      %p182 = pneg %p176
      %p183 = scmp.eq.s32.totalorder %s15, 1
      %p184 = por %p182, %p183
      %p185 = scmp.ne.s32.totalorder %s177, %s180
      %p186 = scmp.eq.s32.totalorder %s15, 0
      %p187 = por %p185, %p186
      %p188 = scmp.ne.s32.totalorder %s177, %s180
      %p189 = scmp.eq.s32.totalorder %s20, 1
      %p190 = por %p188, %p189
      %p191 = scmp.ne.s32.totalorder %s180, %s181
      %p192 = scmp.eq.s32.totalorder %s20, 0
      %p193 = por %p191, %p192
      %p194 = scmp.ne.s32.totalorder %s180, %s181
      %p195 = scmp.eq.s32.totalorder %s21, 1
      %p196 = por %p194, %p195
      %p198 = scmp.ne.s32.totalorder %s181, %s197
      %p199 = scmp.eq.s32.totalorder %s21, 0
      %p200 = por %p198, %p199
      %p201 = scmp.le.s32.totalorder 1, %s15
      %p202 = scmp.lt.s32.totalorder %s15, 3
      %p203 = pnand %p201, %p202
      %p204 = pneg %p203
      // Predicated region
      $region9: #{tpu_custom_call.1} parent=5 // pred_check
        _
      $region10: #{tpu_custom_call.1} parent=5 // pred_check_branch
        %206 = sbr.rel (%p203) target = $region12
      $region11: #{tpu_custom_call.1} parent=5 // pred_region
        %s207 = ssub.s32 %s15, 1
        // Predicated region
        $region13: #{tpu_custom_call.1} parent=11 // pred_check
          %p208 = pneg %p62
        $region14: #{tpu_custom_call.1} parent=11 // pred_check_branch
          %210 = sbr.rel (%p208) target = $region16
        $region15: #{tpu_custom_call.1} parent=11 // pred_region
          %s212 = ssub.s32 512, 512
          %213 = vsyncadd [#allocation3], %s212
          %s214 = sshll.u32 [#allocation2], 4
          %s215 = int_to_ptr.vmem [resolvable:$true] %s214
          %220 = dma.hbm_to_vmem [thread:$0]  %s1, 512, %s215, [#allocation3], 128, 128, 8
        $region16: #{tpu_custom_call.1} parent=11 // pred_fallthru
          _
        // Predicated region
        $region17: #{tpu_custom_call.1} parent=11 // pred_check
          %p221 = pneg %p83
        $region18: #{tpu_custom_call.1} parent=11 // pred_check_branch
          %223 = sbr.rel (%p221) target = $region20
        $region19: #{tpu_custom_call.1} parent=11 // pred_region
          %s225 = ssub.s32 512, 512
          %226 = vsyncadd [#allocation5], %s225
          %s227 = sshll.u32 [#allocation4], 4
          %s228 = int_to_ptr.vmem [resolvable:$true] %s227
          %233 = dma.hbm_to_vmem [thread:$0]  %s2, 512, %s228, [#allocation5], 128, 128, 8
        $region20: #{tpu_custom_call.1} parent=11 // pred_fallthru
          _
        // Predicated region
        $region21: #{tpu_custom_call.1} parent=11 // pred_check
          %p234 = pneg %p104
        $region22: #{tpu_custom_call.1} parent=11 // pred_check_branch
          %236 = sbr.rel (%p234) target = $region24
        $region23: #{tpu_custom_call.1} parent=11 // pred_region
          _
        $region24: #{tpu_custom_call.1} parent=11 // pred_fallthru
          _
        // Predicated region
        $region25: #{tpu_custom_call.1} parent=11 // pred_check
          %p237 = pneg %p125
        $region26: #{tpu_custom_call.1} parent=11 // pred_check_branch
          %239 = sbr.rel (%p237) target = $region28
        $region27: #{tpu_custom_call.1} parent=11 // pred_region
          _
        $region28: #{tpu_custom_call.1} parent=11 // pred_fallthru
          _
        // Predicated region
        $region29: #{tpu_custom_call.1} parent=11 // pred_check
          %p240 = pneg %p146
        $region30: #{tpu_custom_call.1} parent=11 // pred_check_branch
          %242 = sbr.rel (%p240) target = $region32
        $region31: #{tpu_custom_call.1} parent=11 // pred_region
          _
        $region32: #{tpu_custom_call.1} parent=11 // pred_fallthru
          _
        // Predicated region
        $region33: #{tpu_custom_call.1} parent=11 // pred_check
          %p243 = pneg %p167
        $region34: #{tpu_custom_call.1} parent=11 // pred_check_branch
          %245 = sbr.rel (%p243) target = $region36
        $region35: #{tpu_custom_call.1} parent=11 // pred_region
          _
        $region36: #{tpu_custom_call.1} parent=11 // pred_fallthru
          _
      $region12: #{tpu_custom_call.1} parent=5 // pred_fallthru
        _
      %p246 = scmp.lt.s32.totalorder %s15, 2
      // Predicated region
      $region37: #{tpu_custom_call.1} parent=5 // pred_check
        %p247 = pneg %p246
      $region38: #{tpu_custom_call.1} parent=5 // pred_check_branch
        %249 = sbr.rel (%p247) target = $region40
      $region39: #{tpu_custom_call.1} parent=5 // pred_region
        // Predicated region
        $region41: #{tpu_custom_call.1} parent=39 // pred_check
          %p250 = pneg %p35
        $region42: #{tpu_custom_call.1} parent=39 // pred_check_branch
          %252 = sbr.rel (%p250) target = $region44
        $region43: #{tpu_custom_call.1} parent=39 // pred_region
          %p253 = scmp.lt.s32.totalorder %s15, 1
          %s254 = scalar_select %p253, %s15, 1
          %s255 = smul.addr %s254, 2
          %s256 = smul.addr %s255, 8
          %s257 = scalar_lea.vmem %s0, %s256
        $region44: #{tpu_custom_call.1} parent=39 // pred_fallthru
          _
      $region40: #{tpu_custom_call.1} parent=5 // pred_fallthru
        _
      %p258 = scmp.le.s32.totalorder 1, %s15
      %p259 = scmp.lt.s32.totalorder %s15, 3
      %p260 = pnand %p258, %p259
      %p261 = pneg %p260
      // Predicated region
      $region45: #{tpu_custom_call.1} parent=5 // pred_check
        _
      $region46: #{tpu_custom_call.1} parent=5 // pred_check_branch
        %263 = sbr.rel (%p260) target = $region48
      $region47: #{tpu_custom_call.1} parent=5 // pred_region
        %s264 = ssub.s32 %s15, 1
        // Predicated region
        $region49: #{tpu_custom_call.1} parent=47 // pred_check
          %p265 = pneg %p62
        $region50: #{tpu_custom_call.1} parent=47 // pred_check_branch
          %267 = sbr.rel (%p265) target = $region52
        $region51: #{tpu_custom_call.1} parent=47 // pred_region
          %268 = dma.done [#allocation3], 512
        $region52: #{tpu_custom_call.1} parent=47 // pred_fallthru
          _
        // Predicated region
        $region53: #{tpu_custom_call.1} parent=47 // pred_check
          %p269 = pneg %p83
        $region54: #{tpu_custom_call.1} parent=47 // pred_check_branch
          %271 = sbr.rel (%p269) target = $region56
        $region55: #{tpu_custom_call.1} parent=47 // pred_region
          %272 = dma.done [#allocation5], 512
        $region56: #{tpu_custom_call.1} parent=47 // pred_fallthru
          _
        %p273 = scmp.lt.s32.totalorder %s20, 1
        %s274 = scalar_select %p273, %s20, 1
        %s275 = smul.addr %s274, 2
        %s276 = smul.addr %s275, 8
        %s277 = scalar_lea.vmem %s0, %s276
        %p278 = pneg %p41
        %p279 = pneg %p38
        %p280 = pneg %p62
        %p281 = pneg %p59
        %p282 = pneg %p83
        %p283 = pneg %p80
        %p284 = pneg %p104
        %p285 = pneg %p101
        %p286 = pneg %p125
        %p287 = pneg %p122
        %p288 = pneg %p146
        %p289 = pneg %p143
        %p290 = pneg %p167
        %p291 = pneg %p164
        %p292 = pneg %p193
        %p293 = pneg %p190
        %p294 = scmp.lt.s32.totalorder %s20, 1
        %s295 = scalar_select %p294, %s20, 1
        %s296 = smul.addr %s295, 2
        %s297 = smul.addr %s296, 8
        %s298 = scalar_lea.vmem %s7, %s297
        %p299 = scmp.lt.s32.totalorder %s20, 1
        %s300 = scalar_select %p299, %s20, 1
        %s301 = smul.addr %s300, 2
        %s302 = smul.addr %s301, 8
        %s303 = scalar_lea.vmem %s0, %s302
        %p304 = scmp.lt.s32.totalorder %s20, 1
        %s305 = scalar_select %p304, %s20, 1
        %s306 = smul.addr %s305, 2
        %s307 = smul.addr %s306, 8
        %s308 = scalar_lea.vmem %s7, %s307
        %v309 = vld [vmem:[%s303] sm:$0xff]
        %v310 = vld [vmem:[%s303 + $0x8] sm:$0xff]
        %v311 = vld [vmem:[#allocation2] sm:$0xff]
        %v312 = vld [vmem:[#allocation2 + $0x8] sm:$0xff]
        %v313 = vld [vmem:[#allocation2 + $0x10] sm:$0xff]
        %v314 = vld [vmem:[#allocation2 + $0x18] sm:$0xff]
        %v315 = vld [vmem:[%s3] sm:$0x1]
        %v317 = vlaneseq
        %v318 = vshrl.u32 %v317, 7
        %v319 = vsub.s32 0, %v318
        %v320 = vrot.slane %v315, %v319
        %vm322 = vcmask 261120
        %v324 = vsel %vm322, %v309, 0
        %v327 = vsel %vm322, %v310, 0
        %329 = vmatprep.subr.mxu0 0.0
        %330 = vmatpush1.msra.mxu0 %v311
        %331 = vmatprep.subr.mxu0 0.0
        %332 = vmatpush1.msra.mxu0 %v312
        %333 = vmatprep.subr.mxu0 0.0
        %334 = vmatpush1.msra.mxu0 %v313
        %335 = vmatprep.subr.mxu0 0.0
        %336 = vmatpush1.msra.mxu0 %v314
        %337 = vmatprep.subr.mxu0 0.0
        %338 = vmatpush1.msra.mxu0 0.0
        %339 = vmatprep.subr.mxu0 0.0
        %340 = vmatpush1.msra.mxu0 0.0
        %341 = vmatprep.subr.mxu0 0.0
        %342 = vmatpush1.msra.mxu0 0.0
        %343 = vmatprep.subr.mxu0 0.0
        %344 = vmatpush1.msra.mxu0 0.0
        %345 = vmatprep.subr.mxu0 0.0
        %346 = vmatpush1.msra.mxu0 0.0
        %347 = vmatprep.subr.mxu0 0.0
        %348 = vmatpush1.msra.mxu0 0.0
        %349 = vmatprep.subr.mxu0 0.0
        %350 = vmatpush1.msra.mxu0 0.0
        %351 = vmatprep.subr.mxu0 0.0
        %352 = vmatpush1.msra.mxu0 0.0
        %353 = vmatprep.subr.mxu0 0.0
        %354 = vmatpush1.msra.mxu0 0.0
        %355 = vmatprep.subr.mxu0 0.0
        %356 = vmatpush1.msra.mxu0 0.0
        %357 = vmatprep.subr.mxu0 0.0
        %358 = vmatpush1.msra.mxu0 0.0
        %359 = vmatprep.subr.mxu0 0.0
        %360 = vmatpush1.msra.mxu0 0.0
        %361 = vmatprep.subr.mxu0 0.0
        %362 = vmatpush1.msra.mxu0 0.0
        %363 = vmatprep.subr.mxu0 0.0
        %364 = vmatpush1.msra.mxu0 0.0
        %365 = vmatprep.subr.mxu0 0.0
        %366 = vmatpush1.msra.mxu0 0.0
        %367 = vmatprep.subr.mxu0 0.0
        %368 = vmatpush1.msra.mxu0 0.0
        %369 = vmatprep.subr.mxu0 0.0
        %370 = vmatpush1.msra.mxu0 0.0
        %371 = vmatprep.subr.mxu0 0.0
        %372 = vmatpush1.msra.mxu0 0.0
        %373 = vmatprep.subr.mxu0 0.0
        %374 = vmatpush1.msra.mxu0 0.0
        %375 = vmatprep.subr.mxu0 0.0
        %376 = vmatpush1.msra.mxu0 0.0
        %377 = vmatprep.subr.mxu0 0.0
        %378 = vmatpush1.msra.mxu0 0.0
        %379 = vmatprep.subr.mxu0 0.0
        %380 = vmatpush1.msra.mxu0 0.0
        %381 = vmatprep.subr.mxu0 0.0
        %382 = vmatpush1.msra.mxu0 0.0
        %383 = vmatprep.subr.mxu0 0.0
        %384 = vmatpush1.msra.mxu0 0.0
        %385 = vmatprep.subr.mxu0 0.0
        %386 = vmatpush1.msra.mxu0 0.0
        %387 = vmatprep.subr.mxu0 0.0
        %388 = vmatpush1.msra.mxu0 0.0
        %389 = vmatprep.subr.mxu0 0.0
        %390 = vmatpush1.msra.mxu0 0.0
        %391 = vmatprep.subr.mxu0 0.0
        %392 = vmatpush1.msra.mxu0 0.0
        %393 = vmatprep.mubr.f32.mxu0 0.0
        %394 = vmatmul.mubr.f32.gmra.mrb[0].mxu0 %v324
        %v395 = vpop.f32.mrb[0].mxu0
        %v396 = vadd.f32 %v320, %v395
        %v397 = vpop.f32.mrb[0].mxu0
        %398 = vmatprep.mubr.f32.mxu0 0.0
        %399 = vmatmul.mubr.f32.gmra.mrb[0].mxu0 %v327
        %v400 = vpop.f32.mrb[0].mxu0
        %v401 = vadd.f32 %v320, %v400
        %v402 = vpop.f32.mrb[0].mxu0
        %403 = vdwg.mxu0
        %v404 = vld [vmem:[#allocation4] sm:$0xff]
        %v405 = vld [vmem:[#allocation4 + $0x8] sm:$0xff]
        %v406 = vld [vmem:[#allocation4 + $0x10] sm:$0xff]
        %v407 = vld [vmem:[#allocation4 + $0x18] sm:$0xff]
        %v408 = vld [vmem:[%s4] sm:$0x1]
        %v410 = vsel %vm322, 0.0, 0
        %412 = vmatprep.subr.mxu0 0.0
        %413 = vmatpush1.msra.mxu0 %v404
        %414 = vmatprep.subr.mxu0 0.0
        %415 = vmatpush1.msra.mxu0 %v405
        %416 = vmatprep.subr.mxu0 0.0
        %417 = vmatpush1.msra.mxu0 %v406
        %418 = vmatprep.subr.mxu0 0.0
        %419 = vmatpush1.msra.mxu0 %v407
        %420 = vmatprep.subr.mxu0 0.0
        %421 = vmatpush1.msra.mxu0 0.0
        %422 = vmatprep.subr.mxu0 0.0
        %423 = vmatpush1.msra.mxu0 0.0
        %424 = vmatprep.subr.mxu0 0.0
        %425 = vmatpush1.msra.mxu0 0.0
        %426 = vmatprep.subr.mxu0 0.0
        %427 = vmatpush1.msra.mxu0 0.0
        %428 = vmatprep.subr.mxu0 0.0
        %429 = vmatpush1.msra.mxu0 0.0
        %430 = vmatprep.subr.mxu0 0.0
        %431 = vmatpush1.msra.mxu0 0.0
        %432 = vmatprep.subr.mxu0 0.0
        %433 = vmatpush1.msra.mxu0 0.0
        %434 = vmatprep.subr.mxu0 0.0
        %435 = vmatpush1.msra.mxu0 0.0
        %436 = vmatprep.subr.mxu0 0.0
        %437 = vmatpush1.msra.mxu0 0.0
        %438 = vmatprep.subr.mxu0 0.0
        %439 = vmatpush1.msra.mxu0 0.0
        %440 = vmatprep.subr.mxu0 0.0
        %441 = vmatpush1.msra.mxu0 0.0
        %442 = vmatprep.subr.mxu0 0.0
        %443 = vmatpush1.msra.mxu0 0.0
        %444 = vmatprep.subr.mxu0 0.0
        %445 = vmatpush1.msra.mxu0 0.0
        %446 = vmatprep.subr.mxu0 0.0
        %447 = vmatpush1.msra.mxu0 0.0
        %448 = vmatprep.subr.mxu0 0.0
        %449 = vmatpush1.msra.mxu0 0.0
        %450 = vmatprep.subr.mxu0 0.0
        %451 = vmatpush1.msra.mxu0 0.0
        %452 = vmatprep.subr.mxu0 0.0
        %453 = vmatpush1.msra.mxu0 0.0
        %454 = vmatprep.subr.mxu0 0.0
        %455 = vmatpush1.msra.mxu0 0.0
        %456 = vmatprep.subr.mxu0 0.0
        %457 = vmatpush1.msra.mxu0 0.0
        %458 = vmatprep.subr.mxu0 0.0
        %459 = vmatpush1.msra.mxu0 0.0
        %460 = vmatprep.subr.mxu0 0.0
        %461 = vmatpush1.msra.mxu0 0.0
        %462 = vmatprep.subr.mxu0 0.0
        %463 = vmatpush1.msra.mxu0 0.0
        %464 = vmatprep.subr.mxu0 0.0
        %465 = vmatpush1.msra.mxu0 0.0
        %466 = vmatprep.subr.mxu0 0.0
        %467 = vmatpush1.msra.mxu0 0.0
        %468 = vmatprep.subr.mxu0 0.0
        %469 = vmatpush1.msra.mxu0 0.0
        %470 = vmatprep.subr.mxu0 0.0
        %471 = vmatpush1.msra.mxu0 0.0
        %472 = vmatprep.subr.mxu0 0.0
        %473 = vmatpush1.msra.mxu0 0.0
        %474 = vmatprep.subr.mxu0 0.0
        %475 = vmatpush1.msra.mxu0 0.0
        %476 = vmatprep.mubr.f32.mxu0 0.0
        %477 = vmatmul.mubr.f32.gmra.mrb[0].mxu0 %v410
        %v478 = vpop.f32.mrb[0].mxu0
        %v479 = vadd.f32 0.0, %v478
        %v480 = vpop.f32.mrb[0].mxu0
        %481 = vdwg.mxu0
        %v482 = vadd.f32 %v396, %v479
        %v483 = vxor.u32 %v482, 2147483648
        %v484 = vmul.f32 %v483, 1.442695
        %v485 = vpow.pop %v484
        %v486 = vadd.f32 %v485, 1.0
        %v487 = vrcp.pop %v486
        %v488 = vmul.f32 1.0, %v487
        %v490 = vlaneseq
        %v491 = vshrl.u32 %v490, 7
        %v492 = vsub.s32 0, %v491
        %v493 = vrot.slane %v408, %v492
        %494 = vrot.lane.b32.xlu0 %v493, 64
        %v495 = vpop.permute.xlu0 %494
        %v497 = vadd.f32 %v479, %v495
        %499 = vrot.lane.b32.xlu0 %v497, 64
        %v500 = vpop.permute.xlu0 %499
        %v502 = vmul.f32 %v488, %v500
        %504 = vrot.lane.b32.xlu0 %v502, 64
        %v505 = vpop.permute.xlu0 %504
        %v507 = vadd.f32 %v396, %v505
        %v508 = vtanh.pop %v507
        %v509 = vsub.f32 1.0, %v488
        %511 = vrot.lane.b32.xlu0 %v508, 96
        %v512 = vpop.permute.xlu0 %511
        %v514 = vmul.f32 %v509, %v512
        %v515 = vmul.f32 %v488, 0.0
        %v516 = vadd.f32 %v514, %v515
        %518 = vrot.lane.b32.xlu0 %v516, 96
        %v519 = vpop.permute.xlu0 %518
        %v520 = vsel %vm322, %v519, 0
        %522 = vmatprep.subr.mxu0 0.0
        %523 = vmatpush1.msra.mxu0 %v404
        %524 = vmatprep.subr.mxu0 0.0
        %525 = vmatpush1.msra.mxu0 %v405
        %526 = vmatprep.subr.mxu0 0.0
        %527 = vmatpush1.msra.mxu0 %v406
        %528 = vmatprep.subr.mxu0 0.0
        %529 = vmatpush1.msra.mxu0 %v407
        %530 = vmatprep.subr.mxu0 0.0
        %531 = vmatpush1.msra.mxu0 0.0
        %532 = vmatprep.subr.mxu0 0.0
        %533 = vmatpush1.msra.mxu0 0.0
        %534 = vmatprep.subr.mxu0 0.0
        %535 = vmatpush1.msra.mxu0 0.0
        %536 = vmatprep.subr.mxu0 0.0
        %537 = vmatpush1.msra.mxu0 0.0
        %538 = vmatprep.subr.mxu0 0.0
        %539 = vmatpush1.msra.mxu0 0.0
        %540 = vmatprep.subr.mxu0 0.0
        %541 = vmatpush1.msra.mxu0 0.0
        %542 = vmatprep.subr.mxu0 0.0
        %543 = vmatpush1.msra.mxu0 0.0
        %544 = vmatprep.subr.mxu0 0.0
        %545 = vmatpush1.msra.mxu0 0.0
        %546 = vmatprep.subr.mxu0 0.0
        %547 = vmatpush1.msra.mxu0 0.0
        %548 = vmatprep.subr.mxu0 0.0
        %549 = vmatpush1.msra.mxu0 0.0
        %550 = vmatprep.subr.mxu0 0.0
        %551 = vmatpush1.msra.mxu0 0.0
        %552 = vmatprep.subr.mxu0 0.0
        %553 = vmatpush1.msra.mxu0 0.0
        %554 = vmatprep.subr.mxu0 0.0
        %555 = vmatpush1.msra.mxu0 0.0
        %556 = vmatprep.subr.mxu0 0.0
        %557 = vmatpush1.msra.mxu0 0.0
        %558 = vmatprep.subr.mxu0 0.0
        %559 = vmatpush1.msra.mxu0 0.0
        %560 = vmatprep.subr.mxu0 0.0
        %561 = vmatpush1.msra.mxu0 0.0
        %562 = vmatprep.subr.mxu0 0.0
        %563 = vmatpush1.msra.mxu0 0.0
        %564 = vmatprep.subr.mxu0 0.0
        %565 = vmatpush1.msra.mxu0 0.0
        %566 = vmatprep.subr.mxu0 0.0
        %567 = vmatpush1.msra.mxu0 0.0
        %568 = vmatprep.subr.mxu0 0.0
        %569 = vmatpush1.msra.mxu0 0.0
        %570 = vmatprep.subr.mxu0 0.0
        %571 = vmatpush1.msra.mxu0 0.0
        %572 = vmatprep.subr.mxu0 0.0
        %573 = vmatpush1.msra.mxu0 0.0
        %574 = vmatprep.subr.mxu0 0.0
        %575 = vmatpush1.msra.mxu0 0.0
        %576 = vmatprep.subr.mxu0 0.0
        %577 = vmatpush1.msra.mxu0 0.0
        %578 = vmatprep.subr.mxu0 0.0
        %579 = vmatpush1.msra.mxu0 0.0
        %580 = vmatprep.subr.mxu0 0.0
        %581 = vmatpush1.msra.mxu0 0.0
        %582 = vmatprep.subr.mxu0 0.0
        %583 = vmatpush1.msra.mxu0 0.0
        %584 = vmatprep.subr.mxu0 0.0
        %585 = vmatpush1.msra.mxu0 0.0
        %586 = vmatprep.mubr.f32.mxu0 0.0
        %587 = vmatmul.mubr.f32.gmra.mrb[0].mxu0 %v520
        %v588 = vpop.f32.mrb[0].mxu0
        %v589 = vadd.f32 0.0, %v588
        %v590 = vpop.f32.mrb[0].mxu0
        %591 = vdwg.mxu0
        %v593 = vrot.slane %v589, 7
        %v595 = vadd.f32 %v396, %v593
        %v596 = vxor.u32 %v595, 2147483648
        %v597 = vmul.f32 %v596, 1.442695
        %v598 = vpow.pop %v597
        %v599 = vadd.f32 %v598, 1.0
        %v600 = vrcp.pop %v599
        %v601 = vmul.f32 1.0, %v600
        %v602 = vadd.f32 %v589, %v495
        %v604 = vrot.slane %v602, 7
        %605 = vrot.lane.b32.xlu0 %v604, 64
        %v606 = vpop.permute.xlu0 %605
        %v608 = vmul.f32 %v601, %v606
        %610 = vrot.lane.b32.xlu0 %v608, 64
        %v611 = vpop.permute.xlu0 %610
        %v613 = vadd.f32 %v396, %v611
        %v614 = vtanh.pop %v613
        %v615 = vsub.f32 1.0, %v601
        %617 = vrot.lane.b32.xlu0 %v614, 96
        %v618 = vpop.permute.xlu0 %617
        %v620 = vmul.f32 %v615, %v618
        %v621 = vrot.slane %v516, 7
        %v623 = vmul.f32 %v601, %v621
        %v624 = vadd.f32 %v620, %v623
        %v626 = vrot.slane %v624, 1
        %627 = vrot.lane.b32.xlu0 %v626, 96
        %v628 = vpop.permute.xlu0 %627
        %v629 = vsel %vm322, %v628, 0
        %631 = vmatprep.subr.mxu0 0.0
        %632 = vmatpush1.msra.mxu0 %v404
        %633 = vmatprep.subr.mxu0 0.0
        %634 = vmatpush1.msra.mxu0 %v405
        %635 = vmatprep.subr.mxu0 0.0
        %636 = vmatpush1.msra.mxu0 %v406
        %637 = vmatprep.subr.mxu0 0.0
        %638 = vmatpush1.msra.mxu0 %v407
        %639 = vmatprep.subr.mxu0 0.0
        %640 = vmatpush1.msra.mxu0 0.0
        %641 = vmatprep.subr.mxu0 0.0
        %642 = vmatpush1.msra.mxu0 0.0
        %643 = vmatprep.subr.mxu0 0.0
        %644 = vmatpush1.msra.mxu0 0.0
        %645 = vmatprep.subr.mxu0 0.0
        %646 = vmatpush1.msra.mxu0 0.0
        %647 = vmatprep.subr.mxu0 0.0
        %648 = vmatpush1.msra.mxu0 0.0
        %649 = vmatprep.subr.mxu0 0.0
        %650 = vmatpush1.msra.mxu0 0.0
        %651 = vmatprep.subr.mxu0 0.0
        %652 = vmatpush1.msra.mxu0 0.0
        %653 = vmatprep.subr.mxu0 0.0
        %654 = vmatpush1.msra.mxu0 0.0
        %655 = vmatprep.subr.mxu0 0.0
        %656 = vmatpush1.msra.mxu0 0.0
        %657 = vmatprep.subr.mxu0 0.0
        %658 = vmatpush1.msra.mxu0 0.0
        %659 = vmatprep.subr.mxu0 0.0
        %660 = vmatpush1.msra.mxu0 0.0
        %661 = vmatprep.subr.mxu0 0.0
        %662 = vmatpush1.msra.mxu0 0.0
        %663 = vmatprep.subr.mxu0 0.0
        %664 = vmatpush1.msra.mxu0 0.0
        %665 = vmatprep.subr.mxu0 0.0
        %666 = vmatpush1.msra.mxu0 0.0
        %667 = vmatprep.subr.mxu0 0.0
        %668 = vmatpush1.msra.mxu0 0.0
        %669 = vmatprep.subr.mxu0 0.0
        %670 = vmatpush1.msra.mxu0 0.0
        %671 = vmatprep.subr.mxu0 0.0
        %672 = vmatpush1.msra.mxu0 0.0
        %673 = vmatprep.subr.mxu0 0.0
        %674 = vmatpush1.msra.mxu0 0.0
        %675 = vmatprep.subr.mxu0 0.0
        %676 = vmatpush1.msra.mxu0 0.0
        %677 = vmatprep.subr.mxu0 0.0
        %678 = vmatpush1.msra.mxu0 0.0
        %679 = vmatprep.subr.mxu0 0.0
        %680 = vmatpush1.msra.mxu0 0.0
        %681 = vmatprep.subr.mxu0 0.0
        %682 = vmatpush1.msra.mxu0 0.0
        %683 = vmatprep.subr.mxu0 0.0
        %684 = vmatpush1.msra.mxu0 0.0
        %685 = vmatprep.subr.mxu0 0.0
        %686 = vmatpush1.msra.mxu0 0.0
        %687 = vmatprep.subr.mxu0 0.0
        %688 = vmatpush1.msra.mxu0 0.0
        %689 = vmatprep.subr.mxu0 0.0
        %690 = vmatpush1.msra.mxu0 0.0
        %691 = vmatprep.subr.mxu0 0.0
        %692 = vmatpush1.msra.mxu0 0.0
        %693 = vmatprep.subr.mxu0 0.0
        %694 = vmatpush1.msra.mxu0 0.0
        %695 = vmatprep.mubr.f32.mxu0 0.0
        %696 = vmatmul.mubr.f32.gmra.mrb[0].mxu0 %v629
        %v697 = vpop.f32.mrb[0].mxu0
        %v698 = vadd.f32 0.0, %v697
        %v699 = vpop.f32.mrb[0].mxu0
        %700 = vdwg.mxu0
        %v702 = vrot.slane %v698, 6
        %v704 = vadd.f32 %v396, %v702
        %v705 = vxor.u32 %v704, 2147483648
        %v706 = vmul.f32 %v705, 1.442695
        %v707 = vpow.pop %v706
        %v708 = vadd.f32 %v707, 1.0
        %v709 = vrcp.pop %v708
        %v710 = vmul.f32 1.0, %v709
        %v711 = vadd.f32 %v698, %v495
        %v713 = vrot.slane %v711, 6
        %714 = vrot.lane.b32.xlu0 %v713, 64
        %v715 = vpop.permute.xlu0 %714
        %v717 = vmul.f32 %v710, %v715
        %719 = vrot.lane.b32.xlu0 %v717, 64
        %v720 = vpop.permute.xlu0 %719
        %v722 = vadd.f32 %v396, %v720
        %v723 = vtanh.pop %v722
        %v724 = vsub.f32 1.0, %v710
        %726 = vrot.lane.b32.xlu0 %v723, 96
        %v727 = vpop.permute.xlu0 %726
        %v729 = vmul.f32 %v724, %v727
        %v730 = vrot.slane %v624, 7
        %v732 = vmul.f32 %v710, %v730
        %v733 = vadd.f32 %v729, %v732
        %v735 = vrot.slane %v733, 2
        %736 = vrot.lane.b32.xlu0 %v735, 96
        %v737 = vpop.permute.xlu0 %736
        %v738 = vsel %vm322, %v737, 0
        %740 = vmatprep.subr.mxu0 0.0
        %741 = vmatpush1.msra.mxu0 %v404
        %742 = vmatprep.subr.mxu0 0.0
        %743 = vmatpush1.msra.mxu0 %v405
        %744 = vmatprep.subr.mxu0 0.0
        %745 = vmatpush1.msra.mxu0 %v406
        %746 = vmatprep.subr.mxu0 0.0
        %747 = vmatpush1.msra.mxu0 %v407
        %748 = vmatprep.subr.mxu0 0.0
        %749 = vmatpush1.msra.mxu0 0.0
        %750 = vmatprep.subr.mxu0 0.0
        %751 = vmatpush1.msra.mxu0 0.0
        %752 = vmatprep.subr.mxu0 0.0
        %753 = vmatpush1.msra.mxu0 0.0
        %754 = vmatprep.subr.mxu0 0.0
        %755 = vmatpush1.msra.mxu0 0.0
        %756 = vmatprep.subr.mxu0 0.0
        %757 = vmatpush1.msra.mxu0 0.0
        %758 = vmatprep.subr.mxu0 0.0
        %759 = vmatpush1.msra.mxu0 0.0
        %760 = vmatprep.subr.mxu0 0.0
        %761 = vmatpush1.msra.mxu0 0.0
        %762 = vmatprep.subr.mxu0 0.0
        %763 = vmatpush1.msra.mxu0 0.0
        %764 = vmatprep.subr.mxu0 0.0
        %765 = vmatpush1.msra.mxu0 0.0
        %766 = vmatprep.subr.mxu0 0.0
        %767 = vmatpush1.msra.mxu0 0.0
        %768 = vmatprep.subr.mxu0 0.0
        %769 = vmatpush1.msra.mxu0 0.0
        %770 = vmatprep.subr.mxu0 0.0
        %771 = vmatpush1.msra.mxu0 0.0
        %772 = vmatprep.subr.mxu0 0.0
        %773 = vmatpush1.msra.mxu0 0.0
        %774 = vmatprep.subr.mxu0 0.0
        %775 = vmatpush1.msra.mxu0 0.0
        %776 = vmatprep.subr.mxu0 0.0
        %777 = vmatpush1.msra.mxu0 0.0
        %778 = vmatprep.subr.mxu0 0.0
        %779 = vmatpush1.msra.mxu0 0.0
        %780 = vmatprep.subr.mxu0 0.0
        %781 = vmatpush1.msra.mxu0 0.0
        %782 = vmatprep.subr.mxu0 0.0
        %783 = vmatpush1.msra.mxu0 0.0
        %784 = vmatprep.subr.mxu0 0.0
        %785 = vmatpush1.msra.mxu0 0.0
        %786 = vmatprep.subr.mxu0 0.0
        %787 = vmatpush1.msra.mxu0 0.0
        %788 = vmatprep.subr.mxu0 0.0
        %789 = vmatpush1.msra.mxu0 0.0
        %790 = vmatprep.subr.mxu0 0.0
        %791 = vmatpush1.msra.mxu0 0.0
        %792 = vmatprep.subr.mxu0 0.0
        %793 = vmatpush1.msra.mxu0 0.0
        %794 = vmatprep.subr.mxu0 0.0
        %795 = vmatpush1.msra.mxu0 0.0
        %796 = vmatprep.subr.mxu0 0.0
        %797 = vmatpush1.msra.mxu0 0.0
        %798 = vmatprep.subr.mxu0 0.0
        %799 = vmatpush1.msra.mxu0 0.0
        %800 = vmatprep.subr.mxu0 0.0
        %801 = vmatpush1.msra.mxu0 0.0
        %802 = vmatprep.subr.mxu0 0.0
        %803 = vmatpush1.msra.mxu0 0.0
        %804 = vmatprep.mubr.f32.mxu0 0.0
        %805 = vmatmul.mubr.f32.gmra.mrb[0].mxu0 %v738
        %v806 = vpop.f32.mrb[0].mxu0
        %v807 = vadd.f32 0.0, %v806
        %v808 = vpop.f32.mrb[0].mxu0
        %809 = vdwg.mxu0
        %v811 = vrot.slane %v807, 5
        %v813 = vadd.f32 %v396, %v811
        %v814 = vxor.u32 %v813, 2147483648
        %v815 = vmul.f32 %v814, 1.442695
        %v816 = vpow.pop %v815
        %v817 = vadd.f32 %v816, 1.0
        %v818 = vrcp.pop %v817
        %v819 = vmul.f32 1.0, %v818
        %v820 = vadd.f32 %v807, %v495
        %v822 = vrot.slane %v820, 5
        %823 = vrot.lane.b32.xlu0 %v822, 64
        %v824 = vpop.permute.xlu0 %823
        %v826 = vmul.f32 %v819, %v824
        %828 = vrot.lane.b32.xlu0 %v826, 64
        %v829 = vpop.permute.xlu0 %828
        %v831 = vadd.f32 %v396, %v829
        %v832 = vtanh.pop %v831
        %v833 = vsub.f32 1.0, %v819
        %835 = vrot.lane.b32.xlu0 %v832, 96
        %v836 = vpop.permute.xlu0 %835
        %v838 = vmul.f32 %v833, %v836
        %v839 = vrot.slane %v733, 7
        %v841 = vmul.f32 %v819, %v839
        %v842 = vadd.f32 %v838, %v841
        %v844 = vrot.slane %v842, 3
        %845 = vrot.lane.b32.xlu0 %v844, 96
        %v846 = vpop.permute.xlu0 %845
        %v847 = vsel %vm322, %v846, 0
        %849 = vmatprep.subr.mxu0 0.0
        %850 = vmatpush1.msra.mxu0 %v404
        %851 = vmatprep.subr.mxu0 0.0
        %852 = vmatpush1.msra.mxu0 %v405
        %853 = vmatprep.subr.mxu0 0.0
        %854 = vmatpush1.msra.mxu0 %v406
        %855 = vmatprep.subr.mxu0 0.0
        %856 = vmatpush1.msra.mxu0 %v407
        %857 = vmatprep.subr.mxu0 0.0
        %858 = vmatpush1.msra.mxu0 0.0
        %859 = vmatprep.subr.mxu0 0.0
        %860 = vmatpush1.msra.mxu0 0.0
        %861 = vmatprep.subr.mxu0 0.0
        %862 = vmatpush1.msra.mxu0 0.0
        %863 = vmatprep.subr.mxu0 0.0
        %864 = vmatpush1.msra.mxu0 0.0
        %865 = vmatprep.subr.mxu0 0.0
        %866 = vmatpush1.msra.mxu0 0.0
        %867 = vmatprep.subr.mxu0 0.0
        %868 = vmatpush1.msra.mxu0 0.0
        %869 = vmatprep.subr.mxu0 0.0
        %870 = vmatpush1.msra.mxu0 0.0
        %871 = vmatprep.subr.mxu0 0.0
        %872 = vmatpush1.msra.mxu0 0.0
        %873 = vmatprep.subr.mxu0 0.0
        %874 = vmatpush1.msra.mxu0 0.0
        %875 = vmatprep.subr.mxu0 0.0
        %876 = vmatpush1.msra.mxu0 0.0
        %877 = vmatprep.subr.mxu0 0.0
        %878 = vmatpush1.msra.mxu0 0.0
        %879 = vmatprep.subr.mxu0 0.0
        %880 = vmatpush1.msra.mxu0 0.0
        %881 = vmatprep.subr.mxu0 0.0
        %882 = vmatpush1.msra.mxu0 0.0
        %883 = vmatprep.subr.mxu0 0.0
        %884 = vmatpush1.msra.mxu0 0.0
        %885 = vmatprep.subr.mxu0 0.0
        %886 = vmatpush1.msra.mxu0 0.0
        %887 = vmatprep.subr.mxu0 0.0
        %888 = vmatpush1.msra.mxu0 0.0
        %889 = vmatprep.subr.mxu0 0.0
        %890 = vmatpush1.msra.mxu0 0.0
        %891 = vmatprep.subr.mxu0 0.0
        %892 = vmatpush1.msra.mxu0 0.0
        %893 = vmatprep.subr.mxu0 0.0
        %894 = vmatpush1.msra.mxu0 0.0
        %895 = vmatprep.subr.mxu0 0.0
        %896 = vmatpush1.msra.mxu0 0.0
        %897 = vmatprep.subr.mxu0 0.0
        %898 = vmatpush1.msra.mxu0 0.0
        %899 = vmatprep.subr.mxu0 0.0
        %900 = vmatpush1.msra.mxu0 0.0
        %901 = vmatprep.subr.mxu0 0.0
        %902 = vmatpush1.msra.mxu0 0.0
        %903 = vmatprep.subr.mxu0 0.0
        %904 = vmatpush1.msra.mxu0 0.0
        %905 = vmatprep.subr.mxu0 0.0
        %906 = vmatpush1.msra.mxu0 0.0
        %907 = vmatprep.subr.mxu0 0.0
        %908 = vmatpush1.msra.mxu0 0.0
        %909 = vmatprep.subr.mxu0 0.0
        %910 = vmatpush1.msra.mxu0 0.0
        %911 = vmatprep.subr.mxu0 0.0
        %912 = vmatpush1.msra.mxu0 0.0
        %913 = vmatprep.mubr.f32.mxu0 0.0
        %914 = vmatmul.mubr.f32.gmra.mrb[0].mxu0 %v847
        %v915 = vpop.f32.mrb[0].mxu0
        %v916 = vadd.f32 0.0, %v915
        %v917 = vpop.f32.mrb[0].mxu0
        %918 = vdwg.mxu0
        %v920 = vrot.slane %v916, 4
        %v922 = vadd.f32 %v396, %v920
        %v923 = vxor.u32 %v922, 2147483648
        %v924 = vmul.f32 %v923, 1.442695
        %v925 = vpow.pop %v924
        %v926 = vadd.f32 %v925, 1.0
        %v927 = vrcp.pop %v926
        %v928 = vmul.f32 1.0, %v927
        %v929 = vadd.f32 %v916, %v495
        %v931 = vrot.slane %v929, 4
        %932 = vrot.lane.b32.xlu0 %v931, 64
        %v933 = vpop.permute.xlu0 %932
        %v935 = vmul.f32 %v928, %v933
        %937 = vrot.lane.b32.xlu0 %v935, 64
        %v938 = vpop.permute.xlu0 %937
        %v940 = vadd.f32 %v396, %v938
        %v941 = vtanh.pop %v940
        %v942 = vsub.f32 1.0, %v928
        %944 = vrot.lane.b32.xlu0 %v941, 96
        %v945 = vpop.permute.xlu0 %944
        %v947 = vmul.f32 %v942, %v945
        %v948 = vrot.slane %v842, 7
        %v950 = vmul.f32 %v928, %v948
        %v951 = vadd.f32 %v947, %v950
        %v953 = vrot.slane %v951, 4
        %954 = vrot.lane.b32.xlu0 %v953, 96
        %v955 = vpop.permute.xlu0 %954
        %v956 = vsel %vm322, %v955, 0
        %958 = vmatprep.subr.mxu0 0.0
        %959 = vmatpush1.msra.mxu0 %v404
        %960 = vmatprep.subr.mxu0 0.0
        %961 = vmatpush1.msra.mxu0 %v405
        %962 = vmatprep.subr.mxu0 0.0
        %963 = vmatpush1.msra.mxu0 %v406
        %964 = vmatprep.subr.mxu0 0.0
        %965 = vmatpush1.msra.mxu0 %v407
        %966 = vmatprep.subr.mxu0 0.0
        %967 = vmatpush1.msra.mxu0 0.0
        %968 = vmatprep.subr.mxu0 0.0
        %969 = vmatpush1.msra.mxu0 0.0
        %970 = vmatprep.subr.mxu0 0.0
        %971 = vmatpush1.msra.mxu0 0.0
        %972 = vmatprep.subr.mxu0 0.0
        %973 = vmatpush1.msra.mxu0 0.0
        %974 = vmatprep.subr.mxu0 0.0
        %975 = vmatpush1.msra.mxu0 0.0
        %976 = vmatprep.subr.mxu0 0.0
        %977 = vmatpush1.msra.mxu0 0.0
        %978 = vmatprep.subr.mxu0 0.0
        %979 = vmatpush1.msra.mxu0 0.0
        %980 = vmatprep.subr.mxu0 0.0
        %981 = vmatpush1.msra.mxu0 0.0
        %982 = vmatprep.subr.mxu0 0.0
        %983 = vmatpush1.msra.mxu0 0.0
        %984 = vmatprep.subr.mxu0 0.0
        %985 = vmatpush1.msra.mxu0 0.0
        %986 = vmatprep.subr.mxu0 0.0
        %987 = vmatpush1.msra.mxu0 0.0
        %988 = vmatprep.subr.mxu0 0.0
        %989 = vmatpush1.msra.mxu0 0.0
        %990 = vmatprep.subr.mxu0 0.0
        %991 = vmatpush1.msra.mxu0 0.0
        %992 = vmatprep.subr.mxu0 0.0
        %993 = vmatpush1.msra.mxu0 0.0
        %994 = vmatprep.subr.mxu0 0.0
        %995 = vmatpush1.msra.mxu0 0.0
        %996 = vmatprep.subr.mxu0 0.0
        %997 = vmatpush1.msra.mxu0 0.0
        %998 = vmatprep.subr.mxu0 0.0
        %999 = vmatpush1.msra.mxu0 0.0
        %1000 = vmatprep.subr.mxu0 0.0
        %1001 = vmatpush1.msra.mxu0 0.0
        %1002 = vmatprep.subr.mxu0 0.0
        %1003 = vmatpush1.msra.mxu0 0.0
        %1004 = vmatprep.subr.mxu0 0.0
        %1005 = vmatpush1.msra.mxu0 0.0
        %1006 = vmatprep.subr.mxu0 0.0
        %1007 = vmatpush1.msra.mxu0 0.0
        %1008 = vmatprep.subr.mxu0 0.0
        %1009 = vmatpush1.msra.mxu0 0.0
        %1010 = vmatprep.subr.mxu0 0.0
        %1011 = vmatpush1.msra.mxu0 0.0
        %1012 = vmatprep.subr.mxu0 0.0
        %1013 = vmatpush1.msra.mxu0 0.0
        %1014 = vmatprep.subr.mxu0 0.0
        %1015 = vmatpush1.msra.mxu0 0.0
        %1016 = vmatprep.subr.mxu0 0.0
        %1017 = vmatpush1.msra.mxu0 0.0
        %1018 = vmatprep.subr.mxu0 0.0
        %1019 = vmatpush1.msra.mxu0 0.0
        %1020 = vmatprep.subr.mxu0 0.0
        %1021 = vmatpush1.msra.mxu0 0.0
        %1022 = vmatprep.mubr.f32.mxu0 0.0
        %1023 = vmatmul.mubr.f32.gmra.mrb[0].mxu0 %v956
        %v1024 = vpop.f32.mrb[0].mxu0
        %v1025 = vadd.f32 0.0, %v1024
        %v1026 = vpop.f32.mrb[0].mxu0
        %1027 = vdwg.mxu0
        %v1029 = vrot.slane %v1025, 3
        %v1031 = vadd.f32 %v396, %v1029
        %v1032 = vxor.u32 %v1031, 2147483648
        %v1033 = vmul.f32 %v1032, 1.442695
        %v1034 = vpow.pop %v1033
        %v1035 = vadd.f32 %v1034, 1.0
        %v1036 = vrcp.pop %v1035
        %v1037 = vmul.f32 1.0, %v1036
        %v1038 = vadd.f32 %v1025, %v495
        %v1040 = vrot.slane %v1038, 3
        %1041 = vrot.lane.b32.xlu0 %v1040, 64
        %v1042 = vpop.permute.xlu0 %1041
        %v1044 = vmul.f32 %v1037, %v1042
        %1046 = vrot.lane.b32.xlu0 %v1044, 64
        %v1047 = vpop.permute.xlu0 %1046
        %v1049 = vadd.f32 %v396, %v1047
        %v1050 = vtanh.pop %v1049
        %v1051 = vsub.f32 1.0, %v1037
        %1053 = vrot.lane.b32.xlu0 %v1050, 96
        %v1054 = vpop.permute.xlu0 %1053
        %v1056 = vmul.f32 %v1051, %v1054
        %v1057 = vrot.slane %v951, 7
        %v1059 = vmul.f32 %v1037, %v1057
        %v1060 = vadd.f32 %v1056, %v1059
        %v1062 = vrot.slane %v1060, 5
        %1063 = vrot.lane.b32.xlu0 %v1062, 96
        %v1064 = vpop.permute.xlu0 %1063
        %v1065 = vsel %vm322, %v1064, 0
        %1067 = vmatprep.subr.mxu0 0.0
        %1068 = vmatpush1.msra.mxu0 %v404
        %1069 = vmatprep.subr.mxu0 0.0
        %1070 = vmatpush1.msra.mxu0 %v405
        %1071 = vmatprep.subr.mxu0 0.0
        %1072 = vmatpush1.msra.mxu0 %v406
        %1073 = vmatprep.subr.mxu0 0.0
        %1074 = vmatpush1.msra.mxu0 %v407
        %1075 = vmatprep.subr.mxu0 0.0
        %1076 = vmatpush1.msra.mxu0 0.0
        %1077 = vmatprep.subr.mxu0 0.0
        %1078 = vmatpush1.msra.mxu0 0.0
        %1079 = vmatprep.subr.mxu0 0.0
        %1080 = vmatpush1.msra.mxu0 0.0
        %1081 = vmatprep.subr.mxu0 0.0
        %1082 = vmatpush1.msra.mxu0 0.0
        %1083 = vmatprep.subr.mxu0 0.0
        %1084 = vmatpush1.msra.mxu0 0.0
        %1085 = vmatprep.subr.mxu0 0.0
        %1086 = vmatpush1.msra.mxu0 0.0
        %1087 = vmatprep.subr.mxu0 0.0
        %1088 = vmatpush1.msra.mxu0 0.0
        %1089 = vmatprep.subr.mxu0 0.0
        %1090 = vmatpush1.msra.mxu0 0.0
        %1091 = vmatprep.subr.mxu0 0.0
        %1092 = vmatpush1.msra.mxu0 0.0
        %1093 = vmatprep.subr.mxu0 0.0
        %1094 = vmatpush1.msra.mxu0 0.0
        %1095 = vmatprep.subr.mxu0 0.0
        %1096 = vmatpush1.msra.mxu0 0.0
        %1097 = vmatprep.subr.mxu0 0.0
        %1098 = vmatpush1.msra.mxu0 0.0
        %1099 = vmatprep.subr.mxu0 0.0
        %1100 = vmatpush1.msra.mxu0 0.0
        %1101 = vmatprep.subr.mxu0 0.0
        %1102 = vmatpush1.msra.mxu0 0.0
        %1103 = vmatprep.subr.mxu0 0.0
        %1104 = vmatpush1.msra.mxu0 0.0
        %1105 = vmatprep.subr.mxu0 0.0
        %1106 = vmatpush1.msra.mxu0 0.0
        %1107 = vmatprep.subr.mxu0 0.0
        %1108 = vmatpush1.msra.mxu0 0.0
        %1109 = vmatprep.subr.mxu0 0.0
        %1110 = vmatpush1.msra.mxu0 0.0
        %1111 = vmatprep.subr.mxu0 0.0
        %1112 = vmatpush1.msra.mxu0 0.0
        %1113 = vmatprep.subr.mxu0 0.0
        %1114 = vmatpush1.msra.mxu0 0.0
        %1115 = vmatprep.subr.mxu0 0.0
        %1116 = vmatpush1.msra.mxu0 0.0
        %1117 = vmatprep.subr.mxu0 0.0
        %1118 = vmatpush1.msra.mxu0 0.0
        %1119 = vmatprep.subr.mxu0 0.0
        %1120 = vmatpush1.msra.mxu0 0.0
        %1121 = vmatprep.subr.mxu0 0.0
        %1122 = vmatpush1.msra.mxu0 0.0
        %1123 = vmatprep.subr.mxu0 0.0
        %1124 = vmatpush1.msra.mxu0 0.0
        %1125 = vmatprep.subr.mxu0 0.0
        %1126 = vmatpush1.msra.mxu0 0.0
        %1127 = vmatprep.subr.mxu0 0.0
        %1128 = vmatpush1.msra.mxu0 0.0
        %1129 = vmatprep.subr.mxu0 0.0
        %1130 = vmatpush1.msra.mxu0 0.0
        %1131 = vmatprep.mubr.f32.mxu0 0.0
        %1132 = vmatmul.mubr.f32.gmra.mrb[0].mxu0 %v1065
        %v1133 = vpop.f32.mrb[0].mxu0
        %v1134 = vadd.f32 0.0, %v1133
        %v1135 = vpop.f32.mrb[0].mxu0
        %1136 = vdwg.mxu0
        %v1138 = vrot.slane %v1134, 2
        %v1140 = vadd.f32 %v396, %v1138
        %v1141 = vxor.u32 %v1140, 2147483648
        %v1142 = vmul.f32 %v1141, 1.442695
        %v1143 = vpow.pop %v1142
        %v1144 = vadd.f32 %v1143, 1.0
        %v1145 = vrcp.pop %v1144
        %v1146 = vmul.f32 1.0, %v1145
        %v1147 = vadd.f32 %v1134, %v495
        %v1149 = vrot.slane %v1147, 2
        %1150 = vrot.lane.b32.xlu0 %v1149, 64
        %v1151 = vpop.permute.xlu0 %1150
        %v1153 = vmul.f32 %v1146, %v1151
        %1155 = vrot.lane.b32.xlu0 %v1153, 64
        %v1156 = vpop.permute.xlu0 %1155
        %v1158 = vadd.f32 %v396, %v1156
        %v1159 = vtanh.pop %v1158
        %v1160 = vsub.f32 1.0, %v1146
        %1162 = vrot.lane.b32.xlu0 %v1159, 96
        %v1163 = vpop.permute.xlu0 %1162
        %v1165 = vmul.f32 %v1160, %v1163
        %v1166 = vrot.slane %v1060, 7
        %v1168 = vmul.f32 %v1146, %v1166
        %v1169 = vadd.f32 %v1165, %v1168
        %v1171 = vrot.slane %v1169, 6
        %1172 = vrot.lane.b32.xlu0 %v1171, 96
        %v1173 = vpop.permute.xlu0 %1172
        %v1174 = vsel %vm322, %v1173, 0
        %1176 = vmatprep.subr.mxu0 0.0
        %1177 = vmatpush1.msra.mxu0 %v404
        %1178 = vmatprep.subr.mxu0 0.0
        %1179 = vmatpush1.msra.mxu0 %v405
        %1180 = vmatprep.subr.mxu0 0.0
        %1181 = vmatpush1.msra.mxu0 %v406
        %1182 = vmatprep.subr.mxu0 0.0
        %1183 = vmatpush1.msra.mxu0 %v407
        %1184 = vmatprep.subr.mxu0 0.0
        %1185 = vmatpush1.msra.mxu0 0.0
        %1186 = vmatprep.subr.mxu0 0.0
        %1187 = vmatpush1.msra.mxu0 0.0
        %1188 = vmatprep.subr.mxu0 0.0
        %1189 = vmatpush1.msra.mxu0 0.0
        %1190 = vmatprep.subr.mxu0 0.0
        %1191 = vmatpush1.msra.mxu0 0.0
        %1192 = vmatprep.subr.mxu0 0.0
        %1193 = vmatpush1.msra.mxu0 0.0
        %1194 = vmatprep.subr.mxu0 0.0
        %1195 = vmatpush1.msra.mxu0 0.0
        %1196 = vmatprep.subr.mxu0 0.0
        %1197 = vmatpush1.msra.mxu0 0.0
        %1198 = vmatprep.subr.mxu0 0.0
        %1199 = vmatpush1.msra.mxu0 0.0
        %1200 = vmatprep.subr.mxu0 0.0
        %1201 = vmatpush1.msra.mxu0 0.0
        %1202 = vmatprep.subr.mxu0 0.0
        %1203 = vmatpush1.msra.mxu0 0.0
        %1204 = vmatprep.subr.mxu0 0.0
        %1205 = vmatpush1.msra.mxu0 0.0
        %1206 = vmatprep.subr.mxu0 0.0
        %1207 = vmatpush1.msra.mxu0 0.0
        %1208 = vmatprep.subr.mxu0 0.0
        %1209 = vmatpush1.msra.mxu0 0.0
        %1210 = vmatprep.subr.mxu0 0.0
        %1211 = vmatpush1.msra.mxu0 0.0
        %1212 = vmatprep.subr.mxu0 0.0
        %1213 = vmatpush1.msra.mxu0 0.0
        %1214 = vmatprep.subr.mxu0 0.0
        %1215 = vmatpush1.msra.mxu0 0.0
        %1216 = vmatprep.subr.mxu0 0.0
        %1217 = vmatpush1.msra.mxu0 0.0
        %1218 = vmatprep.subr.mxu0 0.0
        %1219 = vmatpush1.msra.mxu0 0.0
        %1220 = vmatprep.subr.mxu0 0.0
        %1221 = vmatpush1.msra.mxu0 0.0
        %1222 = vmatprep.subr.mxu0 0.0
        %1223 = vmatpush1.msra.mxu0 0.0
        %1224 = vmatprep.subr.mxu0 0.0
        %1225 = vmatpush1.msra.mxu0 0.0
        %1226 = vmatprep.subr.mxu0 0.0
        %1227 = vmatpush1.msra.mxu0 0.0
        %1228 = vmatprep.subr.mxu0 0.0
        %1229 = vmatpush1.msra.mxu0 0.0
        %1230 = vmatprep.subr.mxu0 0.0
        %1231 = vmatpush1.msra.mxu0 0.0
        %1232 = vmatprep.subr.mxu0 0.0
        %1233 = vmatpush1.msra.mxu0 0.0
        %1234 = vmatprep.subr.mxu0 0.0
        %1235 = vmatpush1.msra.mxu0 0.0
        %1236 = vmatprep.subr.mxu0 0.0
        %1237 = vmatpush1.msra.mxu0 0.0
        %1238 = vmatprep.subr.mxu0 0.0
        %1239 = vmatpush1.msra.mxu0 0.0
        %1240 = vmatprep.mubr.f32.mxu0 0.0
        %1241 = vmatmul.mubr.f32.gmra.mrb[0].mxu0 %v1174
        %v1242 = vpop.f32.mrb[0].mxu0
        %v1243 = vadd.f32 0.0, %v1242
        %v1244 = vpop.f32.mrb[0].mxu0
        %1245 = vdwg.mxu0
        %v1247 = vrot.slane %v1243, 1
        %v1249 = vadd.f32 %v396, %v1247
        %v1250 = vxor.u32 %v1249, 2147483648
        %v1251 = vmul.f32 %v1250, 1.442695
        %v1252 = vpow.pop %v1251
        %v1253 = vadd.f32 %v1252, 1.0
        %v1254 = vrcp.pop %v1253
        %v1255 = vmul.f32 1.0, %v1254
        %v1256 = vadd.f32 %v1243, %v495
        %v1258 = vrot.slane %v1256, 1
        %1259 = vrot.lane.b32.xlu0 %v1258, 64
        %v1260 = vpop.permute.xlu0 %1259
        %v1262 = vmul.f32 %v1255, %v1260
        %1264 = vrot.lane.b32.xlu0 %v1262, 64
        %v1265 = vpop.permute.xlu0 %1264
        %v1267 = vadd.f32 %v396, %v1265
        %v1268 = vtanh.pop %v1267
        %v1269 = vsub.f32 1.0, %v1255
        %1271 = vrot.lane.b32.xlu0 %v1268, 96
        %v1272 = vpop.permute.xlu0 %1271
        %v1274 = vmul.f32 %v1269, %v1272
        %v1275 = vrot.slane %v1169, 7
        %v1277 = vmul.f32 %v1255, %v1275
        %v1278 = vadd.f32 %v1274, %v1277
        %v1280 = vrot.slane %v1278, 7
        %1281 = vrot.lane.b32.xlu0 %v1280, 96
        %v1282 = vpop.permute.xlu0 %1281
        %v1283 = vsel %vm322, %v1282, 0
        %1285 = vmatprep.subr.mxu0 0.0
        %1286 = vmatpush1.msra.mxu0 %v404
        %1287 = vmatprep.subr.mxu0 0.0
        %1288 = vmatpush1.msra.mxu0 %v405
        %1289 = vmatprep.subr.mxu0 0.0
        %1290 = vmatpush1.msra.mxu0 %v406
        %1291 = vmatprep.subr.mxu0 0.0
        %1292 = vmatpush1.msra.mxu0 %v407
        %1293 = vmatprep.subr.mxu0 0.0
        %1294 = vmatpush1.msra.mxu0 0.0
        %1295 = vmatprep.subr.mxu0 0.0
        %1296 = vmatpush1.msra.mxu0 0.0
        %1297 = vmatprep.subr.mxu0 0.0
        %1298 = vmatpush1.msra.mxu0 0.0
        %1299 = vmatprep.subr.mxu0 0.0
        %1300 = vmatpush1.msra.mxu0 0.0
        %1301 = vmatprep.subr.mxu0 0.0
        %1302 = vmatpush1.msra.mxu0 0.0
        %1303 = vmatprep.subr.mxu0 0.0
        %1304 = vmatpush1.msra.mxu0 0.0
        %1305 = vmatprep.subr.mxu0 0.0
        %1306 = vmatpush1.msra.mxu0 0.0
        %1307 = vmatprep.subr.mxu0 0.0
        %1308 = vmatpush1.msra.mxu0 0.0
        %1309 = vmatprep.subr.mxu0 0.0
        %1310 = vmatpush1.msra.mxu0 0.0
        %1311 = vmatprep.subr.mxu0 0.0
        %1312 = vmatpush1.msra.mxu0 0.0
        %1313 = vmatprep.subr.mxu0 0.0
        %1314 = vmatpush1.msra.mxu0 0.0
        %1315 = vmatprep.subr.mxu0 0.0
        %1316 = vmatpush1.msra.mxu0 0.0
        %1317 = vmatprep.subr.mxu0 0.0
        %1318 = vmatpush1.msra.mxu0 0.0
        %1319 = vmatprep.subr.mxu0 0.0
        %1320 = vmatpush1.msra.mxu0 0.0
        %1321 = vmatprep.subr.mxu0 0.0
        %1322 = vmatpush1.msra.mxu0 0.0
        %1323 = vmatprep.subr.mxu0 0.0
        %1324 = vmatpush1.msra.mxu0 0.0
        %1325 = vmatprep.subr.mxu0 0.0
        %1326 = vmatpush1.msra.mxu0 0.0
        %1327 = vmatprep.subr.mxu0 0.0
        %1328 = vmatpush1.msra.mxu0 0.0
        %1329 = vmatprep.subr.mxu0 0.0
        %1330 = vmatpush1.msra.mxu0 0.0
        %1331 = vmatprep.subr.mxu0 0.0
        %1332 = vmatpush1.msra.mxu0 0.0
        %1333 = vmatprep.subr.mxu0 0.0
        %1334 = vmatpush1.msra.mxu0 0.0
        %1335 = vmatprep.subr.mxu0 0.0
        %1336 = vmatpush1.msra.mxu0 0.0
        %1337 = vmatprep.subr.mxu0 0.0
        %1338 = vmatpush1.msra.mxu0 0.0
        %1339 = vmatprep.subr.mxu0 0.0
        %1340 = vmatpush1.msra.mxu0 0.0
        %1341 = vmatprep.subr.mxu0 0.0
        %1342 = vmatpush1.msra.mxu0 0.0
        %1343 = vmatprep.subr.mxu0 0.0
        %1344 = vmatpush1.msra.mxu0 0.0
        %1345 = vmatprep.subr.mxu0 0.0
        %1346 = vmatpush1.msra.mxu0 0.0
        %1347 = vmatprep.subr.mxu0 0.0
        %1348 = vmatpush1.msra.mxu0 0.0
        %1349 = vmatprep.mubr.f32.mxu0 0.0
        %1350 = vmatmul.mubr.f32.gmra.mrb[0].mxu0 %v1283
        %v1351 = vpop.f32.mrb[0].mxu0
        %v1352 = vadd.f32 0.0, %v1351
        %v1353 = vpop.f32.mrb[0].mxu0
        %1354 = vdwg.mxu0
        %v1355 = vadd.f32 %v401, %v1352
        %v1356 = vxor.u32 %v1355, 2147483648
        %v1357 = vmul.f32 %v1356, 1.442695
        %v1358 = vpow.pop %v1357
        %v1359 = vadd.f32 %v1358, 1.0
        %v1360 = vrcp.pop %v1359
        %v1361 = vmul.f32 1.0, %v1360
        %v1362 = vadd.f32 %v1352, %v495
        %1364 = vrot.lane.b32.xlu0 %v1362, 64
        %v1365 = vpop.permute.xlu0 %1364
        %v1367 = vmul.f32 %v1361, %v1365
        %1369 = vrot.lane.b32.xlu0 %v1367, 64
        %v1370 = vpop.permute.xlu0 %1369
        %v1372 = vadd.f32 %v401, %v1370
        %v1373 = vtanh.pop %v1372
        %v1374 = vsub.f32 1.0, %v1361
        %1376 = vrot.lane.b32.xlu0 %v1373, 96
        %v1377 = vpop.permute.xlu0 %1376
        %v1379 = vmul.f32 %v1374, %v1377
        %v1381 = vmul.f32 %v1361, %v1280
        %v1382 = vadd.f32 %v1379, %v1381
        %1384 = vrot.lane.b32.xlu0 %v1382, 96
        %v1385 = vpop.permute.xlu0 %1384
        %v1386 = vsel %vm322, %v1385, 0
        %1388 = vmatprep.subr.mxu0 0.0
        %1389 = vmatpush1.msra.mxu0 %v404
        %1390 = vmatprep.subr.mxu0 0.0
        %1391 = vmatpush1.msra.mxu0 %v405
        %1392 = vmatprep.subr.mxu0 0.0
        %1393 = vmatpush1.msra.mxu0 %v406
        %1394 = vmatprep.subr.mxu0 0.0
        %1395 = vmatpush1.msra.mxu0 %v407
        %1396 = vmatprep.subr.mxu0 0.0
        %1397 = vmatpush1.msra.mxu0 0.0
        %1398 = vmatprep.subr.mxu0 0.0
        %1399 = vmatpush1.msra.mxu0 0.0
        %1400 = vmatprep.subr.mxu0 0.0
        %1401 = vmatpush1.msra.mxu0 0.0
        %1402 = vmatprep.subr.mxu0 0.0
        %1403 = vmatpush1.msra.mxu0 0.0
        %1404 = vmatprep.subr.mxu0 0.0
        %1405 = vmatpush1.msra.mxu0 0.0
        %1406 = vmatprep.subr.mxu0 0.0
        %1407 = vmatpush1.msra.mxu0 0.0
        %1408 = vmatprep.subr.mxu0 0.0
        %1409 = vmatpush1.msra.mxu0 0.0
        %1410 = vmatprep.subr.mxu0 0.0
        %1411 = vmatpush1.msra.mxu0 0.0
        %1412 = vmatprep.subr.mxu0 0.0
        %1413 = vmatpush1.msra.mxu0 0.0
        %1414 = vmatprep.subr.mxu0 0.0
        %1415 = vmatpush1.msra.mxu0 0.0
        %1416 = vmatprep.subr.mxu0 0.0
        %1417 = vmatpush1.msra.mxu0 0.0
        %1418 = vmatprep.subr.mxu0 0.0
        %1419 = vmatpush1.msra.mxu0 0.0
        %1420 = vmatprep.subr.mxu0 0.0
        %1421 = vmatpush1.msra.mxu0 0.0
        %1422 = vmatprep.subr.mxu0 0.0
        %1423 = vmatpush1.msra.mxu0 0.0
        %1424 = vmatprep.subr.mxu0 0.0
        %1425 = vmatpush1.msra.mxu0 0.0
        %1426 = vmatprep.subr.mxu0 0.0
        %1427 = vmatpush1.msra.mxu0 0.0
        %1428 = vmatprep.subr.mxu0 0.0
        %1429 = vmatpush1.msra.mxu0 0.0
        %1430 = vmatprep.subr.mxu0 0.0
        %1431 = vmatpush1.msra.mxu0 0.0
        %1432 = vmatprep.subr.mxu0 0.0
        %1433 = vmatpush1.msra.mxu0 0.0
        %1434 = vmatprep.subr.mxu0 0.0
        %1435 = vmatpush1.msra.mxu0 0.0
        %1436 = vmatprep.subr.mxu0 0.0
        %1437 = vmatpush1.msra.mxu0 0.0
        %1438 = vmatprep.subr.mxu0 0.0
        %1439 = vmatpush1.msra.mxu0 0.0
        %1440 = vmatprep.subr.mxu0 0.0
        %1441 = vmatpush1.msra.mxu0 0.0
        %1442 = vmatprep.subr.mxu0 0.0
        %1443 = vmatpush1.msra.mxu0 0.0
        %1444 = vmatprep.subr.mxu0 0.0
        %1445 = vmatpush1.msra.mxu0 0.0
        %1446 = vmatprep.subr.mxu0 0.0
        %1447 = vmatpush1.msra.mxu0 0.0
        %1448 = vmatprep.subr.mxu0 0.0
        %1449 = vmatpush1.msra.mxu0 0.0
        %1450 = vmatprep.subr.mxu0 0.0
        %1451 = vmatpush1.msra.mxu0 0.0
        %1452 = vmatprep.mubr.f32.mxu0 0.0
        %1453 = vmatmul.mubr.f32.gmra.mrb[0].mxu0 %v1386
        %v1454 = vpop.f32.mrb[0].mxu0
        %v1455 = vadd.f32 0.0, %v1454
        %v1456 = vpop.f32.mrb[0].mxu0
        %1457 = vdwg.mxu0
        %v1459 = vrot.slane %v1455, 7
        %v1461 = vadd.f32 %v401, %v1459
        %v1462 = vxor.u32 %v1461, 2147483648
        %v1463 = vmul.f32 %v1462, 1.442695
        %v1464 = vpow.pop %v1463
        %v1465 = vadd.f32 %v1464, 1.0
        %v1466 = vrcp.pop %v1465
        %v1467 = vmul.f32 1.0, %v1466
        %v1468 = vadd.f32 %v1455, %v495
        %v1470 = vrot.slane %v1468, 7
        %1471 = vrot.lane.b32.xlu0 %v1470, 64
        %v1472 = vpop.permute.xlu0 %1471
        %v1474 = vmul.f32 %v1467, %v1472
        %1476 = vrot.lane.b32.xlu0 %v1474, 64
        %v1477 = vpop.permute.xlu0 %1476
        %v1479 = vadd.f32 %v401, %v1477
        %v1480 = vtanh.pop %v1479
        %v1481 = vsub.f32 1.0, %v1467
        %1483 = vrot.lane.b32.xlu0 %v1480, 96
        %v1484 = vpop.permute.xlu0 %1483
        %v1486 = vmul.f32 %v1481, %v1484
        %v1487 = vrot.slane %v1382, 7
        %v1489 = vmul.f32 %v1467, %v1487
        %v1490 = vadd.f32 %v1486, %v1489
        %v1492 = vrot.slane %v1490, 1
        %1493 = vrot.lane.b32.xlu0 %v1492, 96
        %v1494 = vpop.permute.xlu0 %1493
        %v1495 = vsel %vm322, %v1494, 0
        %1497 = vmatprep.subr.mxu0 0.0
        %1498 = vmatpush1.msra.mxu0 %v404
        %1499 = vmatprep.subr.mxu0 0.0
        %1500 = vmatpush1.msra.mxu0 %v405
        %1501 = vmatprep.subr.mxu0 0.0
        %1502 = vmatpush1.msra.mxu0 %v406
        %1503 = vmatprep.subr.mxu0 0.0
        %1504 = vmatpush1.msra.mxu0 %v407
        %1505 = vmatprep.subr.mxu0 0.0
        %1506 = vmatpush1.msra.mxu0 0.0
        %1507 = vmatprep.subr.mxu0 0.0
        %1508 = vmatpush1.msra.mxu0 0.0
        %1509 = vmatprep.subr.mxu0 0.0
        %1510 = vmatpush1.msra.mxu0 0.0
        %1511 = vmatprep.subr.mxu0 0.0
        %1512 = vmatpush1.msra.mxu0 0.0
        %1513 = vmatprep.subr.mxu0 0.0
        %1514 = vmatpush1.msra.mxu0 0.0
        %1515 = vmatprep.subr.mxu0 0.0
        %1516 = vmatpush1.msra.mxu0 0.0
        %1517 = vmatprep.subr.mxu0 0.0
        %1518 = vmatpush1.msra.mxu0 0.0
        %1519 = vmatprep.subr.mxu0 0.0
        %1520 = vmatpush1.msra.mxu0 0.0
        %1521 = vmatprep.subr.mxu0 0.0
        %1522 = vmatpush1.msra.mxu0 0.0
        %1523 = vmatprep.subr.mxu0 0.0
        %1524 = vmatpush1.msra.mxu0 0.0
        %1525 = vmatprep.subr.mxu0 0.0
        %1526 = vmatpush1.msra.mxu0 0.0
        %1527 = vmatprep.subr.mxu0 0.0
        %1528 = vmatpush1.msra.mxu0 0.0
        %1529 = vmatprep.subr.mxu0 0.0
        %1530 = vmatpush1.msra.mxu0 0.0
        %1531 = vmatprep.subr.mxu0 0.0
        %1532 = vmatpush1.msra.mxu0 0.0
        %1533 = vmatprep.subr.mxu0 0.0
        %1534 = vmatpush1.msra.mxu0 0.0
        %1535 = vmatprep.subr.mxu0 0.0
        %1536 = vmatpush1.msra.mxu0 0.0
        %1537 = vmatprep.subr.mxu0 0.0
        %1538 = vmatpush1.msra.mxu0 0.0
        %1539 = vmatprep.subr.mxu0 0.0
        %1540 = vmatpush1.msra.mxu0 0.0
        %1541 = vmatprep.subr.mxu0 0.0
        %1542 = vmatpush1.msra.mxu0 0.0
        %1543 = vmatprep.subr.mxu0 0.0
        %1544 = vmatpush1.msra.mxu0 0.0
        %1545 = vmatprep.subr.mxu0 0.0
        %1546 = vmatpush1.msra.mxu0 0.0
        %1547 = vmatprep.subr.mxu0 0.0
        %1548 = vmatpush1.msra.mxu0 0.0
        %1549 = vmatprep.subr.mxu0 0.0
        %1550 = vmatpush1.msra.mxu0 0.0
        %1551 = vmatprep.subr.mxu0 0.0
        %1552 = vmatpush1.msra.mxu0 0.0
        %1553 = vmatprep.subr.mxu0 0.0
        %1554 = vmatpush1.msra.mxu0 0.0
        %1555 = vmatprep.subr.mxu0 0.0
        %1556 = vmatpush1.msra.mxu0 0.0
        %1557 = vmatprep.subr.mxu0 0.0
        %1558 = vmatpush1.msra.mxu0 0.0
        %1559 = vmatprep.subr.mxu0 0.0
        %1560 = vmatpush1.msra.mxu0 0.0
        %1561 = vmatprep.mubr.f32.mxu0 0.0
        %1562 = vmatmul.mubr.f32.gmra.mrb[0].mxu0 %v1495
        %v1563 = vpop.f32.mrb[0].mxu0
        %v1564 = vadd.f32 0.0, %v1563
        %v1565 = vpop.f32.mrb[0].mxu0
        %1566 = vdwg.mxu0
        %v1568 = vrot.slane %v1564, 6
        %v1570 = vadd.f32 %v401, %v1568
        %v1571 = vxor.u32 %v1570, 2147483648
        %v1572 = vmul.f32 %v1571, 1.442695
        %v1573 = vpow.pop %v1572
        %v1574 = vadd.f32 %v1573, 1.0
        %v1575 = vrcp.pop %v1574
        %v1576 = vmul.f32 1.0, %v1575
        %v1577 = vadd.f32 %v1564, %v495
        %v1579 = vrot.slane %v1577, 6
        %1580 = vrot.lane.b32.xlu0 %v1579, 64
        %v1581 = vpop.permute.xlu0 %1580
        %v1583 = vmul.f32 %v1576, %v1581
        %1585 = vrot.lane.b32.xlu0 %v1583, 64
        %v1586 = vpop.permute.xlu0 %1585
        %v1588 = vadd.f32 %v401, %v1586
        %v1589 = vtanh.pop %v1588
        %v1590 = vsub.f32 1.0, %v1576
        %1592 = vrot.lane.b32.xlu0 %v1589, 96
        %v1593 = vpop.permute.xlu0 %1592
        %v1595 = vmul.f32 %v1590, %v1593
        %v1596 = vrot.slane %v1490, 7
        %v1598 = vmul.f32 %v1576, %v1596
        %v1599 = vadd.f32 %v1595, %v1598
        %v1601 = vrot.slane %v1599, 2
        %1602 = vrot.lane.b32.xlu0 %v1601, 96
        %v1603 = vpop.permute.xlu0 %1602
        %v1604 = vsel %vm322, %v1603, 0
        %1606 = vmatprep.subr.mxu0 0.0
        %1607 = vmatpush1.msra.mxu0 %v404
        %1608 = vmatprep.subr.mxu0 0.0
        %1609 = vmatpush1.msra.mxu0 %v405
        %1610 = vmatprep.subr.mxu0 0.0
        %1611 = vmatpush1.msra.mxu0 %v406
        %1612 = vmatprep.subr.mxu0 0.0
        %1613 = vmatpush1.msra.mxu0 %v407
        %1614 = vmatprep.subr.mxu0 0.0
        %1615 = vmatpush1.msra.mxu0 0.0
        %1616 = vmatprep.subr.mxu0 0.0
        %1617 = vmatpush1.msra.mxu0 0.0
        %1618 = vmatprep.subr.mxu0 0.0
        %1619 = vmatpush1.msra.mxu0 0.0
        %1620 = vmatprep.subr.mxu0 0.0
        %1621 = vmatpush1.msra.mxu0 0.0
        %1622 = vmatprep.subr.mxu0 0.0
        %1623 = vmatpush1.msra.mxu0 0.0
        %1624 = vmatprep.subr.mxu0 0.0
        %1625 = vmatpush1.msra.mxu0 0.0
        %1626 = vmatprep.subr.mxu0 0.0
        %1627 = vmatpush1.msra.mxu0 0.0
        %1628 = vmatprep.subr.mxu0 0.0
        %1629 = vmatpush1.msra.mxu0 0.0
        %1630 = vmatprep.subr.mxu0 0.0
        %1631 = vmatpush1.msra.mxu0 0.0
        %1632 = vmatprep.subr.mxu0 0.0
        %1633 = vmatpush1.msra.mxu0 0.0
        %1634 = vmatprep.subr.mxu0 0.0
        %1635 = vmatpush1.msra.mxu0 0.0
        %1636 = vmatprep.subr.mxu0 0.0
        %1637 = vmatpush1.msra.mxu0 0.0
        %1638 = vmatprep.subr.mxu0 0.0
        %1639 = vmatpush1.msra.mxu0 0.0
        %1640 = vmatprep.subr.mxu0 0.0
        %1641 = vmatpush1.msra.mxu0 0.0
        %1642 = vmatprep.subr.mxu0 0.0
        %1643 = vmatpush1.msra.mxu0 0.0
        %1644 = vmatprep.subr.mxu0 0.0
        %1645 = vmatpush1.msra.mxu0 0.0
        %1646 = vmatprep.subr.mxu0 0.0
        %1647 = vmatpush1.msra.mxu0 0.0
        %1648 = vmatprep.subr.mxu0 0.0
        %1649 = vmatpush1.msra.mxu0 0.0
        %1650 = vmatprep.subr.mxu0 0.0
        %1651 = vmatpush1.msra.mxu0 0.0
        %1652 = vmatprep.subr.mxu0 0.0
        %1653 = vmatpush1.msra.mxu0 0.0
        %1654 = vmatprep.subr.mxu0 0.0
        %1655 = vmatpush1.msra.mxu0 0.0
        %1656 = vmatprep.subr.mxu0 0.0
        %1657 = vmatpush1.msra.mxu0 0.0
        %1658 = vmatprep.subr.mxu0 0.0
        %1659 = vmatpush1.msra.mxu0 0.0
        %1660 = vmatprep.subr.mxu0 0.0
        %1661 = vmatpush1.msra.mxu0 0.0
        %1662 = vmatprep.subr.mxu0 0.0
        %1663 = vmatpush1.msra.mxu0 0.0
        %1664 = vmatprep.subr.mxu0 0.0
        %1665 = vmatpush1.msra.mxu0 0.0
        %1666 = vmatprep.subr.mxu0 0.0
        %1667 = vmatpush1.msra.mxu0 0.0
        %1668 = vmatprep.subr.mxu0 0.0
        %1669 = vmatpush1.msra.mxu0 0.0
        %1670 = vmatprep.mubr.f32.mxu0 0.0
        %1671 = vmatmul.mubr.f32.gmra.mrb[0].mxu0 %v1604
        %v1672 = vpop.f32.mrb[0].mxu0
        %v1673 = vadd.f32 0.0, %v1672
        %v1674 = vpop.f32.mrb[0].mxu0
        %1675 = vdwg.mxu0
        %v1677 = vrot.slane %v1673, 5
        %v1679 = vadd.f32 %v401, %v1677
        %v1680 = vxor.u32 %v1679, 2147483648
        %v1681 = vmul.f32 %v1680, 1.442695
        %v1682 = vpow.pop %v1681
        %v1683 = vadd.f32 %v1682, 1.0
        %v1684 = vrcp.pop %v1683
        %v1685 = vmul.f32 1.0, %v1684
        %v1686 = vadd.f32 %v1673, %v495
        %v1688 = vrot.slane %v1686, 5
        %1689 = vrot.lane.b32.xlu0 %v1688, 64
        %v1690 = vpop.permute.xlu0 %1689
        %v1692 = vmul.f32 %v1685, %v1690
        %1694 = vrot.lane.b32.xlu0 %v1692, 64
        %v1695 = vpop.permute.xlu0 %1694
        %v1697 = vadd.f32 %v401, %v1695
        %v1698 = vtanh.pop %v1697
        %v1699 = vsub.f32 1.0, %v1685
        %1701 = vrot.lane.b32.xlu0 %v1698, 96
        %v1702 = vpop.permute.xlu0 %1701
        %v1704 = vmul.f32 %v1699, %v1702
        %v1705 = vrot.slane %v1599, 7
        %v1707 = vmul.f32 %v1685, %v1705
        %v1708 = vadd.f32 %v1704, %v1707
        %v1710 = vrot.slane %v1708, 3
        %1711 = vrot.lane.b32.xlu0 %v1710, 96
        %v1712 = vpop.permute.xlu0 %1711
        %v1713 = vsel %vm322, %v1712, 0
        %1715 = vmatprep.subr.mxu0 0.0
        %1716 = vmatpush1.msra.mxu0 %v404
        %1717 = vmatprep.subr.mxu0 0.0
        %1718 = vmatpush1.msra.mxu0 %v405
        %1719 = vmatprep.subr.mxu0 0.0
        %1720 = vmatpush1.msra.mxu0 %v406
        %1721 = vmatprep.subr.mxu0 0.0
        %1722 = vmatpush1.msra.mxu0 %v407
        %1723 = vmatprep.subr.mxu0 0.0
        %1724 = vmatpush1.msra.mxu0 0.0
        %1725 = vmatprep.subr.mxu0 0.0
        %1726 = vmatpush1.msra.mxu0 0.0
        %1727 = vmatprep.subr.mxu0 0.0
        %1728 = vmatpush1.msra.mxu0 0.0
        %1729 = vmatprep.subr.mxu0 0.0
        %1730 = vmatpush1.msra.mxu0 0.0
        %1731 = vmatprep.subr.mxu0 0.0
        %1732 = vmatpush1.msra.mxu0 0.0
        %1733 = vmatprep.subr.mxu0 0.0
        %1734 = vmatpush1.msra.mxu0 0.0
        %1735 = vmatprep.subr.mxu0 0.0
        %1736 = vmatpush1.msra.mxu0 0.0
        %1737 = vmatprep.subr.mxu0 0.0
        %1738 = vmatpush1.msra.mxu0 0.0
        %1739 = vmatprep.subr.mxu0 0.0
        %1740 = vmatpush1.msra.mxu0 0.0
        %1741 = vmatprep.subr.mxu0 0.0
        %1742 = vmatpush1.msra.mxu0 0.0
        %1743 = vmatprep.subr.mxu0 0.0
        %1744 = vmatpush1.msra.mxu0 0.0
        %1745 = vmatprep.subr.mxu0 0.0
        %1746 = vmatpush1.msra.mxu0 0.0
        %1747 = vmatprep.subr.mxu0 0.0
        %1748 = vmatpush1.msra.mxu0 0.0
        %1749 = vmatprep.subr.mxu0 0.0
        %1750 = vmatpush1.msra.mxu0 0.0
        %1751 = vmatprep.subr.mxu0 0.0
        %1752 = vmatpush1.msra.mxu0 0.0
        %1753 = vmatprep.subr.mxu0 0.0
        %1754 = vmatpush1.msra.mxu0 0.0
        %1755 = vmatprep.subr.mxu0 0.0
        %1756 = vmatpush1.msra.mxu0 0.0
        %1757 = vmatprep.subr.mxu0 0.0
        %1758 = vmatpush1.msra.mxu0 0.0
        %1759 = vmatprep.subr.mxu0 0.0
        %1760 = vmatpush1.msra.mxu0 0.0
        %1761 = vmatprep.subr.mxu0 0.0
        %1762 = vmatpush1.msra.mxu0 0.0
        %1763 = vmatprep.subr.mxu0 0.0
        %1764 = vmatpush1.msra.mxu0 0.0
        %1765 = vmatprep.subr.mxu0 0.0
        %1766 = vmatpush1.msra.mxu0 0.0
        %1767 = vmatprep.subr.mxu0 0.0
        %1768 = vmatpush1.msra.mxu0 0.0
        %1769 = vmatprep.subr.mxu0 0.0
        %1770 = vmatpush1.msra.mxu0 0.0
        %1771 = vmatprep.subr.mxu0 0.0
        %1772 = vmatpush1.msra.mxu0 0.0
        %1773 = vmatprep.subr.mxu0 0.0
        %1774 = vmatpush1.msra.mxu0 0.0
        %1775 = vmatprep.subr.mxu0 0.0
        %1776 = vmatpush1.msra.mxu0 0.0
        %1777 = vmatprep.subr.mxu0 0.0
        %1778 = vmatpush1.msra.mxu0 0.0
        %1779 = vmatprep.mubr.f32.mxu0 0.0
        %1780 = vmatmul.mubr.f32.gmra.mrb[0].mxu0 %v1713
        %v1781 = vpop.f32.mrb[0].mxu0
        %v1782 = vadd.f32 0.0, %v1781
        %v1783 = vpop.f32.mrb[0].mxu0
        %1784 = vdwg.mxu0
        %v1786 = vrot.slane %v1782, 4
        %v1788 = vadd.f32 %v401, %v1786
        %v1789 = vxor.u32 %v1788, 2147483648
        %v1790 = vmul.f32 %v1789, 1.442695
        %v1791 = vpow.pop %v1790
        %v1792 = vadd.f32 %v1791, 1.0
        %v1793 = vrcp.pop %v1792
        %v1794 = vmul.f32 1.0, %v1793
        %v1795 = vadd.f32 %v1782, %v495
        %v1797 = vrot.slane %v1795, 4
        %1798 = vrot.lane.b32.xlu0 %v1797, 64
        %v1799 = vpop.permute.xlu0 %1798
        %v1801 = vmul.f32 %v1794, %v1799
        %1803 = vrot.lane.b32.xlu0 %v1801, 64
        %v1804 = vpop.permute.xlu0 %1803
        %v1806 = vadd.f32 %v401, %v1804
        %v1807 = vtanh.pop %v1806
        %v1808 = vsub.f32 1.0, %v1794
        %1810 = vrot.lane.b32.xlu0 %v1807, 96
        %v1811 = vpop.permute.xlu0 %1810
        %v1813 = vmul.f32 %v1808, %v1811
        %v1814 = vrot.slane %v1708, 7
        %v1816 = vmul.f32 %v1794, %v1814
        %v1817 = vadd.f32 %v1813, %v1816
        %v1819 = vrot.slane %v1817, 4
        %1820 = vrot.lane.b32.xlu0 %v1819, 96
        %v1821 = vpop.permute.xlu0 %1820
        %v1822 = vsel %vm322, %v1821, 0
        %1824 = vmatprep.subr.mxu0 0.0
        %1825 = vmatpush1.msra.mxu0 %v404
        %1826 = vmatprep.subr.mxu0 0.0
        %1827 = vmatpush1.msra.mxu0 %v405
        %1828 = vmatprep.subr.mxu0 0.0
        %1829 = vmatpush1.msra.mxu0 %v406
        %1830 = vmatprep.subr.mxu0 0.0
        %1831 = vmatpush1.msra.mxu0 %v407
        %1832 = vmatprep.subr.mxu0 0.0
        %1833 = vmatpush1.msra.mxu0 0.0
        %1834 = vmatprep.subr.mxu0 0.0
        %1835 = vmatpush1.msra.mxu0 0.0
        %1836 = vmatprep.subr.mxu0 0.0
        %1837 = vmatpush1.msra.mxu0 0.0
        %1838 = vmatprep.subr.mxu0 0.0
        %1839 = vmatpush1.msra.mxu0 0.0
        %1840 = vmatprep.subr.mxu0 0.0
        %1841 = vmatpush1.msra.mxu0 0.0
        %1842 = vmatprep.subr.mxu0 0.0
        %1843 = vmatpush1.msra.mxu0 0.0
        %1844 = vmatprep.subr.mxu0 0.0
        %1845 = vmatpush1.msra.mxu0 0.0
        %1846 = vmatprep.subr.mxu0 0.0
        %1847 = vmatpush1.msra.mxu0 0.0
        %1848 = vmatprep.subr.mxu0 0.0
        %1849 = vmatpush1.msra.mxu0 0.0
        %1850 = vmatprep.subr.mxu0 0.0
        %1851 = vmatpush1.msra.mxu0 0.0
        %1852 = vmatprep.subr.mxu0 0.0
        %1853 = vmatpush1.msra.mxu0 0.0
        %1854 = vmatprep.subr.mxu0 0.0
        %1855 = vmatpush1.msra.mxu0 0.0
        %1856 = vmatprep.subr.mxu0 0.0
        %1857 = vmatpush1.msra.mxu0 0.0
        %1858 = vmatprep.subr.mxu0 0.0
        %1859 = vmatpush1.msra.mxu0 0.0
        %1860 = vmatprep.subr.mxu0 0.0
        %1861 = vmatpush1.msra.mxu0 0.0
        %1862 = vmatprep.subr.mxu0 0.0
        %1863 = vmatpush1.msra.mxu0 0.0
        %1864 = vmatprep.subr.mxu0 0.0
        %1865 = vmatpush1.msra.mxu0 0.0
        %1866 = vmatprep.subr.mxu0 0.0
        %1867 = vmatpush1.msra.mxu0 0.0
        %1868 = vmatprep.subr.mxu0 0.0
        %1869 = vmatpush1.msra.mxu0 0.0
        %1870 = vmatprep.subr.mxu0 0.0
        %1871 = vmatpush1.msra.mxu0 0.0
        %1872 = vmatprep.subr.mxu0 0.0
        %1873 = vmatpush1.msra.mxu0 0.0
        %1874 = vmatprep.subr.mxu0 0.0
        %1875 = vmatpush1.msra.mxu0 0.0
        %1876 = vmatprep.subr.mxu0 0.0
        %1877 = vmatpush1.msra.mxu0 0.0
        %1878 = vmatprep.subr.mxu0 0.0
        %1879 = vmatpush1.msra.mxu0 0.0
        %1880 = vmatprep.subr.mxu0 0.0
        %1881 = vmatpush1.msra.mxu0 0.0
        %1882 = vmatprep.subr.mxu0 0.0
        %1883 = vmatpush1.msra.mxu0 0.0
        %1884 = vmatprep.subr.mxu0 0.0
        %1885 = vmatpush1.msra.mxu0 0.0
        %1886 = vmatprep.subr.mxu0 0.0
        %1887 = vmatpush1.msra.mxu0 0.0
        %1888 = vmatprep.mubr.f32.mxu0 0.0
        %1889 = vmatmul.mubr.f32.gmra.mrb[0].mxu0 %v1822
        %v1890 = vpop.f32.mrb[0].mxu0
        %v1891 = vadd.f32 0.0, %v1890
        %v1892 = vpop.f32.mrb[0].mxu0
        %1893 = vdwg.mxu0
        %v1895 = vrot.slane %v1891, 3
        %v1897 = vadd.f32 %v401, %v1895
        %v1898 = vxor.u32 %v1897, 2147483648
        %v1899 = vmul.f32 %v1898, 1.442695
        %v1900 = vpow.pop %v1899
        %v1901 = vadd.f32 %v1900, 1.0
        %v1902 = vrcp.pop %v1901
        %v1903 = vmul.f32 1.0, %v1902
        %v1904 = vadd.f32 %v1891, %v495
        %v1906 = vrot.slane %v1904, 3
        %1907 = vrot.lane.b32.xlu0 %v1906, 64
        %v1908 = vpop.permute.xlu0 %1907
        %v1910 = vmul.f32 %v1903, %v1908
        %1912 = vrot.lane.b32.xlu0 %v1910, 64
        %v1913 = vpop.permute.xlu0 %1912
        %v1915 = vadd.f32 %v401, %v1913
        %v1916 = vtanh.pop %v1915
        %v1917 = vsub.f32 1.0, %v1903
        %1919 = vrot.lane.b32.xlu0 %v1916, 96
        %v1920 = vpop.permute.xlu0 %1919
        %v1922 = vmul.f32 %v1917, %v1920
        %v1923 = vrot.slane %v1817, 7
        %v1925 = vmul.f32 %v1903, %v1923
        %v1926 = vadd.f32 %v1922, %v1925
        %v1928 = vrot.slane %v1926, 5
        %1929 = vrot.lane.b32.xlu0 %v1928, 96
        %v1930 = vpop.permute.xlu0 %1929
        %v1931 = vsel %vm322, %v1930, 0
        %1933 = vmatprep.subr.mxu0 0.0
        %1934 = vmatpush1.msra.mxu0 %v404
        %1935 = vmatprep.subr.mxu0 0.0
        %1936 = vmatpush1.msra.mxu0 %v405
        %1937 = vmatprep.subr.mxu0 0.0
        %1938 = vmatpush1.msra.mxu0 %v406
        %1939 = vmatprep.subr.mxu0 0.0
        %1940 = vmatpush1.msra.mxu0 %v407
        %1941 = vmatprep.subr.mxu0 0.0
        %1942 = vmatpush1.msra.mxu0 0.0
        %1943 = vmatprep.subr.mxu0 0.0
        %1944 = vmatpush1.msra.mxu0 0.0
        %1945 = vmatprep.subr.mxu0 0.0
        %1946 = vmatpush1.msra.mxu0 0.0
        %1947 = vmatprep.subr.mxu0 0.0
        %1948 = vmatpush1.msra.mxu0 0.0
        %1949 = vmatprep.subr.mxu0 0.0
        %1950 = vmatpush1.msra.mxu0 0.0
        %1951 = vmatprep.subr.mxu0 0.0
        %1952 = vmatpush1.msra.mxu0 0.0
        %1953 = vmatprep.subr.mxu0 0.0
        %1954 = vmatpush1.msra.mxu0 0.0
        %1955 = vmatprep.subr.mxu0 0.0
        %1956 = vmatpush1.msra.mxu0 0.0
        %1957 = vmatprep.subr.mxu0 0.0
        %1958 = vmatpush1.msra.mxu0 0.0
        %1959 = vmatprep.subr.mxu0 0.0
        %1960 = vmatpush1.msra.mxu0 0.0
        %1961 = vmatprep.subr.mxu0 0.0
        %1962 = vmatpush1.msra.mxu0 0.0
        %1963 = vmatprep.subr.mxu0 0.0
        %1964 = vmatpush1.msra.mxu0 0.0
        %1965 = vmatprep.subr.mxu0 0.0
        %1966 = vmatpush1.msra.mxu0 0.0
        %1967 = vmatprep.subr.mxu0 0.0
        %1968 = vmatpush1.msra.mxu0 0.0
        %1969 = vmatprep.subr.mxu0 0.0
        %1970 = vmatpush1.msra.mxu0 0.0
        %1971 = vmatprep.subr.mxu0 0.0
        %1972 = vmatpush1.msra.mxu0 0.0
        %1973 = vmatprep.subr.mxu0 0.0
        %1974 = vmatpush1.msra.mxu0 0.0
        %1975 = vmatprep.subr.mxu0 0.0
        %1976 = vmatpush1.msra.mxu0 0.0
        %1977 = vmatprep.subr.mxu0 0.0
        %1978 = vmatpush1.msra.mxu0 0.0
        %1979 = vmatprep.subr.mxu0 0.0
        %1980 = vmatpush1.msra.mxu0 0.0
        %1981 = vmatprep.subr.mxu0 0.0
        %1982 = vmatpush1.msra.mxu0 0.0
        %1983 = vmatprep.subr.mxu0 0.0
        %1984 = vmatpush1.msra.mxu0 0.0
        %1985 = vmatprep.subr.mxu0 0.0
        %1986 = vmatpush1.msra.mxu0 0.0
        %1987 = vmatprep.subr.mxu0 0.0
        %1988 = vmatpush1.msra.mxu0 0.0
        %1989 = vmatprep.subr.mxu0 0.0
        %1990 = vmatpush1.msra.mxu0 0.0
        %1991 = vmatprep.subr.mxu0 0.0
        %1992 = vmatpush1.msra.mxu0 0.0
        %1993 = vmatprep.subr.mxu0 0.0
        %1994 = vmatpush1.msra.mxu0 0.0
        %1995 = vmatprep.subr.mxu0 0.0
        %1996 = vmatpush1.msra.mxu0 0.0
        %1997 = vmatprep.mubr.f32.mxu0 0.0
        %1998 = vmatmul.mubr.f32.gmra.mrb[0].mxu0 %v1931
        %v1999 = vpop.f32.mrb[0].mxu0
        %v2000 = vadd.f32 0.0, %v1999
        %v2001 = vpop.f32.mrb[0].mxu0
        %2002 = vdwg.mxu0
        %v2004 = vrot.slane %v2000, 2
        %v2006 = vadd.f32 %v401, %v2004
        %v2007 = vxor.u32 %v2006, 2147483648
        %v2008 = vmul.f32 %v2007, 1.442695
        %v2009 = vpow.pop %v2008
        %v2010 = vadd.f32 %v2009, 1.0
        %v2011 = vrcp.pop %v2010
        %v2012 = vmul.f32 1.0, %v2011
        %v2013 = vadd.f32 %v2000, %v495
        %v2015 = vrot.slane %v2013, 2
        %2016 = vrot.lane.b32.xlu0 %v2015, 64
        %v2017 = vpop.permute.xlu0 %2016
        %v2019 = vmul.f32 %v2012, %v2017
        %2021 = vrot.lane.b32.xlu0 %v2019, 64
        %v2022 = vpop.permute.xlu0 %2021
        %v2024 = vadd.f32 %v401, %v2022
        %v2025 = vtanh.pop %v2024
        %v2026 = vsub.f32 1.0, %v2012
        %2028 = vrot.lane.b32.xlu0 %v2025, 96
        %v2029 = vpop.permute.xlu0 %2028
        %v2031 = vmul.f32 %v2026, %v2029
        %v2032 = vrot.slane %v1926, 7
        %v2034 = vmul.f32 %v2012, %v2032
        %v2035 = vadd.f32 %v2031, %v2034
        %v2037 = vrot.slane %v2035, 6
        %2038 = vrot.lane.b32.xlu0 %v2037, 96
        %v2039 = vpop.permute.xlu0 %2038
        %v2040 = vsel %vm322, %v2039, 0
        %2042 = vmatprep.subr.mxu0 0.0
        %2043 = vmatpush1.msra.mxu0 %v404
        %2044 = vmatprep.subr.mxu0 0.0
        %2045 = vmatpush1.msra.mxu0 %v405
        %2046 = vmatprep.subr.mxu0 0.0
        %2047 = vmatpush1.msra.mxu0 %v406
        %2048 = vmatprep.subr.mxu0 0.0
        %2049 = vmatpush1.msra.mxu0 %v407
        %2050 = vmatprep.subr.mxu0 0.0
        %2051 = vmatpush1.msra.mxu0 0.0
        %2052 = vmatprep.subr.mxu0 0.0
        %2053 = vmatpush1.msra.mxu0 0.0
        %2054 = vmatprep.subr.mxu0 0.0
        %2055 = vmatpush1.msra.mxu0 0.0
        %2056 = vmatprep.subr.mxu0 0.0
        %2057 = vmatpush1.msra.mxu0 0.0
        %2058 = vmatprep.subr.mxu0 0.0
        %2059 = vmatpush1.msra.mxu0 0.0
        %2060 = vmatprep.subr.mxu0 0.0
        %2061 = vmatpush1.msra.mxu0 0.0
        %2062 = vmatprep.subr.mxu0 0.0
        %2063 = vmatpush1.msra.mxu0 0.0
        %2064 = vmatprep.subr.mxu0 0.0
        %2065 = vmatpush1.msra.mxu0 0.0
        %2066 = vmatprep.subr.mxu0 0.0
        %2067 = vmatpush1.msra.mxu0 0.0
        %2068 = vmatprep.subr.mxu0 0.0
        %2069 = vmatpush1.msra.mxu0 0.0
        %2070 = vmatprep.subr.mxu0 0.0
        %2071 = vmatpush1.msra.mxu0 0.0
        %2072 = vmatprep.subr.mxu0 0.0
        %2073 = vmatpush1.msra.mxu0 0.0
        %2074 = vmatprep.subr.mxu0 0.0
        %2075 = vmatpush1.msra.mxu0 0.0
        %2076 = vmatprep.subr.mxu0 0.0
        %2077 = vmatpush1.msra.mxu0 0.0
        %2078 = vmatprep.subr.mxu0 0.0
        %2079 = vmatpush1.msra.mxu0 0.0
        %2080 = vmatprep.subr.mxu0 0.0
        %2081 = vmatpush1.msra.mxu0 0.0
        %2082 = vmatprep.subr.mxu0 0.0
        %2083 = vmatpush1.msra.mxu0 0.0
        %2084 = vmatprep.subr.mxu0 0.0
        %2085 = vmatpush1.msra.mxu0 0.0
        %2086 = vmatprep.subr.mxu0 0.0
        %2087 = vmatpush1.msra.mxu0 0.0
        %2088 = vmatprep.subr.mxu0 0.0
        %2089 = vmatpush1.msra.mxu0 0.0
        %2090 = vmatprep.subr.mxu0 0.0
        %2091 = vmatpush1.msra.mxu0 0.0
        %2092 = vmatprep.subr.mxu0 0.0
        %2093 = vmatpush1.msra.mxu0 0.0
        %2094 = vmatprep.subr.mxu0 0.0
        %2095 = vmatpush1.msra.mxu0 0.0
        %2096 = vmatprep.subr.mxu0 0.0
        %2097 = vmatpush1.msra.mxu0 0.0
        %2098 = vmatprep.subr.mxu0 0.0
        %2099 = vmatpush1.msra.mxu0 0.0
        %2100 = vmatprep.subr.mxu0 0.0
        %2101 = vmatpush1.msra.mxu0 0.0
        %2102 = vmatprep.subr.mxu0 0.0
        %2103 = vmatpush1.msra.mxu0 0.0
        %2104 = vmatprep.subr.mxu0 0.0
        %2105 = vmatpush1.msra.mxu0 0.0
        %2106 = vmatprep.mubr.f32.mxu0 0.0
        %2107 = vmatmul.mubr.f32.gmra.mrb[0].mxu0 %v2040
        %v2108 = vpop.f32.mrb[0].mxu0
        %v2109 = vadd.f32 0.0, %v2108
        %v2110 = vpop.f32.mrb[0].mxu0
        %2111 = vdwg.mxu0
        %v2113 = vrot.slane %v2109, 1
        %v2115 = vadd.f32 %v401, %v2113
        %v2116 = vxor.u32 %v2115, 2147483648
        %v2117 = vmul.f32 %v2116, 1.442695
        %v2118 = vpow.pop %v2117
        %v2119 = vadd.f32 %v2118, 1.0
        %v2120 = vrcp.pop %v2119
        %v2121 = vmul.f32 1.0, %v2120
        %v2122 = vadd.f32 %v2109, %v495
        %v2124 = vrot.slane %v2122, 1
        %2125 = vrot.lane.b32.xlu0 %v2124, 64
        %v2126 = vpop.permute.xlu0 %2125
        %v2128 = vmul.f32 %v2121, %v2126
        %2130 = vrot.lane.b32.xlu0 %v2128, 64
        %v2131 = vpop.permute.xlu0 %2130
        %v2133 = vadd.f32 %v401, %v2131
        %v2134 = vtanh.pop %v2133
        %v2135 = vsub.f32 1.0, %v2121
        %2137 = vrot.lane.b32.xlu0 %v2134, 96
        %v2138 = vpop.permute.xlu0 %2137
        %v2140 = vmul.f32 %v2135, %v2138
        %v2141 = vrot.slane %v2035, 7
        %v2143 = vmul.f32 %v2121, %v2141
        %v2144 = vadd.f32 %v2140, %v2143
        %vm2145 = vcmask 1040384
        %v2146 = vsel %vm2145, %v516, %v624
        %vm2147 = vcmask 1041408
        %v2148 = vsel %vm2147, %v2146, %v733
        %vm2149 = vcmask 1042432
        %v2150 = vsel %vm2149, %v2148, %v842
        %vm2151 = vcmask 1043456
        %v2152 = vsel %vm2151, %v2150, %v951
        %vm2153 = vcmask 1044480
        %v2154 = vsel %vm2153, %v2152, %v1060
        %vm2155 = vcmask 1045504
        %v2156 = vsel %vm2155, %v2154, %v1169
        %vm2157 = vcmask 1046528
        %v2158 = vsel %vm2157, %v2156, %v1278
        %v2159 = vsel %vm2145, %v1382, %v1490
        %v2160 = vsel %vm2147, %v2159, %v1599
        %v2161 = vsel %vm2149, %v2160, %v1708
        %v2162 = vsel %vm2151, %v2161, %v1817
        %v2163 = vsel %vm2153, %v2162, %v1926
        %v2164 = vsel %vm2155, %v2163, %v2035
        %v2165 = vsel %vm2157, %v2164, %v2144
        %v2166 = vld [vmem:[%s5] sm:$0xff]
        %v2167 = vld [vmem:[%s5 + $0x8] sm:$0xff]
        %v2168 = vld [vmem:[%s5 + $0x10] sm:$0xff]
        %v2169 = vld [vmem:[%s5 + $0x18] sm:$0xff]
        %v2170 = vld [vmem:[%s6] sm:$0x1]
        %v2172 = vlaneseq
        %v2173 = vshrl.u32 %v2172, 7
        %v2174 = vsub.s32 0, %v2173
        %v2175 = vrot.slane %v2170, %v2174
        %2179 = vrot.lane.b32.xlu0 %v2158, 96
        %v2180 = vpop.permute.xlu0 %2179
        %2181 = vrot.lane.b32.xlu0 %v2165, 96
        %v2182 = vpop.permute.xlu0 %2181
        %v2183 = vsel %vm322, %v2180, 0
        %v2185 = vsel %vm322, %v2182, 0
        %2187 = vmatprep.subr.mxu0 0.0
        %2188 = vmatpush1.msra.mxu0 %v2166
        %2189 = vmatprep.subr.mxu0 0.0
        %2190 = vmatpush1.msra.mxu0 %v2167
        %2191 = vmatprep.subr.mxu0 0.0
        %2192 = vmatpush1.msra.mxu0 %v2168
        %2193 = vmatprep.subr.mxu0 0.0
        %2194 = vmatpush1.msra.mxu0 %v2169
        %2195 = vmatprep.subr.mxu0 0.0
        %2196 = vmatpush1.msra.mxu0 0.0
        %2197 = vmatprep.subr.mxu0 0.0
        %2198 = vmatpush1.msra.mxu0 0.0
        %2199 = vmatprep.subr.mxu0 0.0
        %2200 = vmatpush1.msra.mxu0 0.0
        %2201 = vmatprep.subr.mxu0 0.0
        %2202 = vmatpush1.msra.mxu0 0.0
        %2203 = vmatprep.subr.mxu0 0.0
        %2204 = vmatpush1.msra.mxu0 0.0
        %2205 = vmatprep.subr.mxu0 0.0
        %2206 = vmatpush1.msra.mxu0 0.0
        %2207 = vmatprep.subr.mxu0 0.0
        %2208 = vmatpush1.msra.mxu0 0.0
        %2209 = vmatprep.subr.mxu0 0.0
        %2210 = vmatpush1.msra.mxu0 0.0
        %2211 = vmatprep.subr.mxu0 0.0
        %2212 = vmatpush1.msra.mxu0 0.0
        %2213 = vmatprep.subr.mxu0 0.0
        %2214 = vmatpush1.msra.mxu0 0.0
        %2215 = vmatprep.subr.mxu0 0.0
        %2216 = vmatpush1.msra.mxu0 0.0
        %2217 = vmatprep.subr.mxu0 0.0
        %2218 = vmatpush1.msra.mxu0 0.0
        %2219 = vmatprep.subr.mxu0 0.0
        %2220 = vmatpush1.msra.mxu0 0.0
        %2221 = vmatprep.subr.mxu0 0.0
        %2222 = vmatpush1.msra.mxu0 0.0
        %2223 = vmatprep.subr.mxu0 0.0
        %2224 = vmatpush1.msra.mxu0 0.0
        %2225 = vmatprep.subr.mxu0 0.0
        %2226 = vmatpush1.msra.mxu0 0.0
        %2227 = vmatprep.subr.mxu0 0.0
        %2228 = vmatpush1.msra.mxu0 0.0
        %2229 = vmatprep.subr.mxu0 0.0
        %2230 = vmatpush1.msra.mxu0 0.0
        %2231 = vmatprep.subr.mxu0 0.0
        %2232 = vmatpush1.msra.mxu0 0.0
        %2233 = vmatprep.subr.mxu0 0.0
        %2234 = vmatpush1.msra.mxu0 0.0
        %2235 = vmatprep.subr.mxu0 0.0
        %2236 = vmatpush1.msra.mxu0 0.0
        %2237 = vmatprep.subr.mxu0 0.0
        %2238 = vmatpush1.msra.mxu0 0.0
        %2239 = vmatprep.subr.mxu0 0.0
        %2240 = vmatpush1.msra.mxu0 0.0
        %2241 = vmatprep.subr.mxu0 0.0
        %2242 = vmatpush1.msra.mxu0 0.0
        %2243 = vmatprep.subr.mxu0 0.0
        %2244 = vmatpush1.msra.mxu0 0.0
        %2245 = vmatprep.subr.mxu0 0.0
        %2246 = vmatpush1.msra.mxu0 0.0
        %2247 = vmatprep.subr.mxu0 0.0
        %2248 = vmatpush1.msra.mxu0 0.0
        %2249 = vmatprep.subr.mxu0 0.0
        %2250 = vmatpush1.msra.mxu0 0.0
        %2251 = vmatprep.mubr.f32.mxu0 0.0
        %2252 = vmatmul.mubr.f32.gmra.mrb[0].mxu0 %v2183
        %v2253 = vpop.f32.mrb[0].mxu0
        %v2254 = vadd.f32 %v2175, %v2253
        %v2255 = vpop.f32.mrb[0].mxu0
        %2256 = vmatprep.mubr.f32.mxu0 0.0
        %2257 = vmatmul.mubr.f32.gmra.mrb[0].mxu0 %v2185
        %v2258 = vpop.f32.mrb[0].mxu0
        %v2259 = vadd.f32 %v2175, %v2258
        %v2260 = vpop.f32.mrb[0].mxu0
        %2261 = vdwg.mxu0
        %vm2262 = vcmp.gt.f32.partialorder %v2254, 0.0
        %vm2263 = vcmp.gt.f32.partialorder %v2259, 0.0
        %v2264 = vmul.f32 %v2254, 0.01
        %v2265 = vmul.f32 %v2259, 0.01
        %v2266 = vsel %vm2262, %v2254, %v2264
        %v2267 = vsel %vm2263, %v2259, %v2265
        %vm2268 = vcmask 64512
        %2269 = vst.msk [vmem:[%s308] sm:$0xff] %vm2268, %v2266
        %2270 = vst.msk [vmem:[%s308 + $0x8] sm:$0xff] %vm2268, %v2267
        %p2271 = scmp.lt.s32.totalorder %s20, 1
        %s2272 = scalar_select %p2271, %s20, 1
        %s2273 = smul.addr %s2272, 2
        %s2274 = smul.addr %s2273, 8
        %s2275 = scalar_lea.vmem %s7, %s2274
        // Predicated region
        $region57: #{tpu_custom_call.1} parent=47 // pred_check
          %p2276 = pneg %p190
        $region58: #{tpu_custom_call.1} parent=47 // pred_check_branch
          %2278 = sbr.rel (%p2276) target = $region60
        $region59: #{tpu_custom_call.1} parent=47 // pred_region
          _
        $region60: #{tpu_custom_call.1} parent=47 // pred_fallthru
          _
      $region48: #{tpu_custom_call.1} parent=5 // pred_fallthru
        _
      %p2279 = scmp.le.s32.totalorder 2, %s15
      // Predicated region
      $region61: #{tpu_custom_call.1} parent=5 // pred_check
        %p2280 = pneg %p2279
      $region62: #{tpu_custom_call.1} parent=5 // pred_check_branch
        %2282 = sbr.rel (%p2280) target = $region64
      $region63: #{tpu_custom_call.1} parent=5 // pred_region
        %s2283 = ssub.s32 %s15, 2
        // Predicated region
        $region65: #{tpu_custom_call.1} parent=63 // pred_check
          %p2284 = pneg %p196
        $region66: #{tpu_custom_call.1} parent=63 // pred_check_branch
          %2286 = sbr.rel (%p2284) target = $region68
        $region67: #{tpu_custom_call.1} parent=63 // pred_region
          %p2287 = scmp.lt.s32.totalorder %s21, 1
          %s2288 = scalar_select %p2287, %s21, 1
          %s2289 = smul.addr %s2288, 2
          %s2290 = smul.addr %s2289, 8
          %s2291 = scalar_lea.vmem %s7, %s2290
        $region68: #{tpu_custom_call.1} parent=63 // pred_fallthru
          _
      $region64: #{tpu_custom_call.1} parent=5 // pred_fallthru
        _
    $region6: #{tpu_custom_call.1} parent=1 // loop_footer
      %s19 = sadd.s32 1, %s15
    $region7: #{tpu_custom_call.1} parent=1 // loop_footer_branch
      %14 = sbr.rel target = $region3
    $region8: #{tpu_custom_call.1} parent=1 // loop_exit
      _
    %2292 = vsyncpa [#allocation3], 1
    %s2293 = scalar_lea.sflag [#allocation3], 1
    %2294 = vsyncpa %s2293, 1
    %2295 = vsyncpa [#allocation5], 1

</llo_original>
